<compile_context>
chip_gen: v5e
topology: v5e:2x2
jax: 0.10.0
libtpu: 0.0.40
codegen_flags: <defaults>
</compile_context>

<pallas_src>
import functools

import jax
import jax.numpy as jnp
from jax import lax
from jax.experimental import pallas as pl
from jax.experimental.pallas import tpu as pltpu


# ------------------------------ Pallas kernel --------------------------------

def _downblock_kernel(*refs, N, H, W, Cin, Cout, Ho, Wo, num_convs, pool):
    """Fused DownBlock forward; the whole batch is resident in VMEM.

    refs = (x, w_0, b_0, ..., w_{k-1}, b_{k-1}, out, [pool_tmp,] pad_in[, pad_hid])
      x:        (N, H, W, Cin)            NHWC input
      w_i:      (9*Cin_i, Cout)           im2col weight (kh-major, kw, cin rows)
      b_i:      (1, Cout)
      out:      (N, Ho*Wo*Cout)           lane-dense flattened NHWC output
      pool_tmp: (N, Ho, W, Cin)           H-pooled staging buffer (pool only)
      pad_in:   (N, Ho+2, Wo+2, Cin)      zero-padded input of conv 0
      pad_hid:  (N, Ho+2, Wo+2, Cout)     zero-padded input of convs 1..k-1
    """
    x_ref = refs[0]
    w_refs = [refs[1 + 2 * i] for i in range(num_convs)]
    b_refs = [refs[2 + 2 * i] for i in range(num_convs)]
    o_ref = refs[1 + 2 * num_convs]
    scratch = list(refs[2 + 2 * num_convs:])
    if pool:
        pool_tmp = scratch.pop(0)
    pad_refs = scratch

    # ---- MaxPool2d(kernel=2, stride=2), floor mode ---------------------------
    if pool:
        # H direction: max of even/odd rows (strided load on an untiled dim).
        rows_even = x_ref[:, pl.ds(0, Ho, stride=2), :, :]
        rows_odd = x_ref[:, pl.ds(1, Ho, stride=2), :, :]
        pool_tmp[...] = jnp.maximum(rows_even, rows_odd)
        # W direction: max of even/odd columns (strided sublane loads).
        cols_even = pool_tmp[:, :, pl.ds(0, Wo, stride=2), :]
        cols_odd = pool_tmp[:, :, pl.ds(1, Wo, stride=2), :]
        cur = jnp.maximum(cols_even, cols_odd)            # (N, Ho, Wo, Cin)
    else:
        cur = x_ref[...]                                   # (N, Ho, Wo, Cin)

    # ---- conv stack: pad in VMEM -> im2col -> single MXU matmul -> ReLU -----
    for pr in pad_refs:
        pr[...] = jnp.zeros_like(pr)                       # zero borders once

    M = N * Ho * Wo
    for i in range(num_convs):
        pr = pad_refs[0] if i == 0 else pad_refs[-1]
        cc = pr.shape[-1]                                  # in-channels of conv i
        co = w_refs[i].shape[-1]                           # out-channels (=Cout)
        pr[:, 1:Ho + 1, 1:Wo + 1, :] = cur.astype(pr.dtype)

        # im2col: 9 shifted views concatenated along lanes -> (M, 9*cc)
        cols = []
        for kh in range(3):
            for kw in range(3):
                cols.append(pr[:, kh:kh + Ho, kw:kw + Wo, :].reshape(M, cc))
        patches = jnp.concatenate(cols, axis=-1)

        acc = jnp.dot(patches, w_refs[i][...],
                      preferred_element_type=jnp.float32)  # (M, co)
        acc = jnp.maximum(acc + b_refs[i][...], 0.0)       # bias + ReLU

        if i + 1 < num_convs:
            cur = acc.reshape(N, Ho, Wo, co)
        else:
            # Densify to (N, Ho*Wo*Cout) using only minor-dim-preserving
            # reshapes, middle-dim indexing and lane-axis concats.
            a = acc.reshape(N * Ho, Wo, co)
            a = jnp.concatenate([a[:, j, :] for j in range(Wo)], axis=-1)
            a = a.reshape(N, Ho, Wo * co)
            a = jnp.concatenate([a[:, j, :] for j in range(Ho)], axis=-1)
            o_ref[...] = a.astype(o_ref.dtype)


# --------------------------------- wrapper -----------------------------------

def downblock_forward(x_nchw, params, *, pool=True):
    """Forward pass matching the PyTorch DownBlock. Input/output are NCHW."""
    ws = params["w_im2col"]           # list of (9*Cin_i, Cout), hoisted at init
    bs = params["b_row"]              # list of (1, Cout)
    num_convs = len(ws)
    N, Cin, H, W = x_nchw.shape
    Cout = ws[0].shape[-1]
    Ho, Wo = (H // 2, W // 2) if pool else (H, W)

    x_nhwc = jnp.transpose(x_nchw, (0, 2, 3, 1))

    kernel = functools.partial(
        _downblock_kernel, N=N, H=H, W=W, Cin=Cin, Cout=Cout,
        Ho=Ho, Wo=Wo, num_convs=num_convs, pool=pool)

    in_specs = [pl.BlockSpec((N, H, W, Cin), lambda i: (0, 0, 0, 0))]
    flat_params = []
    for w, b in zip(ws, bs):
        in_specs.append(pl.BlockSpec(w.shape, lambda i: (0, 0)))
        in_specs.append(pl.BlockSpec(b.shape, lambda i: (0, 0)))
        flat_params += [w, b]

    scratch_shapes = []
    if pool:
        scratch_shapes.append(pltpu.VMEM((N, Ho, W, Cin), jnp.float32))
    scratch_shapes.append(pltpu.VMEM((N, Ho + 2, Wo + 2, Cin), jnp.float32))
    if num_convs > 1:
        scratch_shapes.append(pltpu.VMEM((N, Ho + 2, Wo + 2, Cout), jnp.float32))

    out_flat = pl.pallas_call(
        kernel,
        out_shape=jax.ShapeDtypeStruct((N, Ho * Wo * Cout), jnp.float32),
        grid=(1,),
        in_specs=in_specs,
        out_specs=pl.BlockSpec((N, Ho * Wo * Cout), lambda i: (0, 0)),
        scratch_shapes=scratch_shapes,
        compiler_params=pltpu.CompilerParams(
            dimension_semantics=("arbitrary",)),
    )(x_nhwc, *flat_params)

    out_nhwc = out_flat.reshape(N, Ho, Wo, Cout)
    return jnp.transpose(out_nhwc, (0, 3, 1, 2))


# ------------------------------ params / reference ---------------------------

def init_downblock_params(key, num_convs, inchannels, outchannels):
    keys = jax.random.split(key, 2 * num_convs)
    torch_params, w_im2col, b_row = [], [], []
    cin = inchannels
    for i in range(num_convs):
        w = 0.1 * jax.random.normal(keys[2 * i], (outchannels, cin, 3, 3),
                                    jnp.float32)          # PyTorch OIHW layout
        b = 0.1 * jax.random.normal(keys[2 * i + 1], (outchannels,), jnp.float32)
        torch_params.append((w, b))
        # (Cout, Cin, kh, kw) -> (kh, kw, Cin, Cout) -> (9*Cin, Cout): row index
        # kh*3*Cin + kw*Cin + ci matches the kernel's im2col column ordering.
        w_im2col.append(jnp.transpose(w, (2, 3, 1, 0)).reshape(9 * cin, outchannels))
        b_row.append(b.reshape(1, outchannels))
        cin = outchannels
    return dict(torch=torch_params, w_im2col=w_im2col, b_row=b_row)


def downblock_forward_ref(x_nchw, torch_params, *, pool=True):
    """Plain-JAX reference with PyTorch-exact semantics (NCHW, OIHW weights)."""
    y = x_nchw
    if pool:
        y = lax.reduce_window(y, -jnp.inf, lax.max,
                              (1, 1, 2, 2), (1, 1, 2, 2), "VALID")
    for w, b in torch_params:
        y = lax.conv_general_dilated(
            y, w, window_strides=(1, 1), padding=((1, 1), (1, 1)),
            dimension_numbers=("NCHW", "OIHW", "NCHW"),
            precision=lax.Precision.HIGHEST)
        y = jnp.maximum(y + b[None, :, None, None], 0.0)
    return y


# ----------------------------------- main -------------------------------------

if __name__ == "__main__":
    num_convs, inchannels, outchannels = 2, 4, 8
    N, H, W = 2, 16, 16

    key = jax.random.PRNGKey(0)
    kx, kp = jax.random.split(key)
    x = jax.random.normal(kx, (N, inchannels, H, W), jnp.float32)  # NCHW
    params = init_downblock_params(kp, num_convs, inchannels, outchannels)

    fwd = jax.jit(functools.partial(downblock_forward, pool=True))
    out = jax.block_until_ready(fwd(x, params))

    ref = downblock_forward_ref(x, params["torch"], pool=True)
    assert out.shape == (N, outchannels, H // 2, W // 2), out.shape
    max_err = float(jnp.max(jnp.abs(out - ref)))
    assert max_err < 1e-3, f"mismatch vs reference: {max_err}"

    print("KERNEL_OK")
</pallas_src>

<mosaic_0001>
module attributes {stable_mosaic.version = 11 : i64} {
  func.func @_downblock_kernel(%arg0: i32, %arg1: memref<2x16x16x4xf32, #tpu.memory_space<vmem>>, %arg2: memref<36x8xf32, #tpu.memory_space<vmem>>, %arg3: memref<1x8xf32, #tpu.memory_space<vmem>>, %arg4: memref<72x8xf32, #tpu.memory_space<vmem>>, %arg5: memref<1x8xf32, #tpu.memory_space<vmem>>, %arg6: memref<2x512xf32, #tpu.memory_space<vmem>>, %arg7: memref<2x8x16x4xf32, #tpu.memory_space<vmem>>, %arg8: memref<2x10x10x4xf32, #tpu.memory_space<vmem>>, %arg9: memref<2x10x10x8xf32, #tpu.memory_space<vmem>>) attributes {dimension_semantics = [#tpu.dimension_semantics<arbitrary>], iteration_bounds = array<i64: 1>, scalar_prefetch = 0 : i64, scratch_operands = 3 : i64, tpu.core_type = #tpu.core_type<tc>, window_params = [{pipeline_mode = #tpu.pipeline_mode<synchronous>, transform_indices = @transform_0, window_bounds = array<i64: 2, 16, 16, 4>}, {pipeline_mode = #tpu.pipeline_mode<synchronous>, transform_indices = @transform_1, window_bounds = array<i64: 36, 8>}, {pipeline_mode = #tpu.pipeline_mode<synchronous>, transform_indices = @transform_2, window_bounds = array<i64: 1, 8>}, {pipeline_mode = #tpu.pipeline_mode<synchronous>, transform_indices = @transform_3, window_bounds = array<i64: 72, 8>}, {pipeline_mode = #tpu.pipeline_mode<synchronous>, transform_indices = @transform_4, window_bounds = array<i64: 1, 8>}, {pipeline_mode = #tpu.pipeline_mode<synchronous>, transform_indices = @transform_5, window_bounds = array<i64: 2, 512>}]} {
    %c0 = arith.constant 0 : index
    %c0_0 = arith.constant 0 : index
    %c0_1 = arith.constant 0 : index
    %c0_2 = arith.constant 0 : index
    %0 = tpu.strided_load %arg1[%c0, %c0_0, %c0_1, %c0_2] {strides = array<i32: 1, 2, 1, 1>} : memref<2x16x16x4xf32, #tpu.memory_space<vmem>>, vector<2x8x16x4xf32>
    %c0_3 = arith.constant 0 : index
    %c1 = arith.constant 1 : index
    %c0_4 = arith.constant 0 : index
    %c0_5 = arith.constant 0 : index
    %1 = tpu.strided_load %arg1[%c0_3, %c1, %c0_4, %c0_5] {strides = array<i32: 1, 2, 1, 1>} : memref<2x16x16x4xf32, #tpu.memory_space<vmem>>, vector<2x8x16x4xf32>
    %2 = arith.maximumf %0, %1 : vector<2x8x16x4xf32>
    %c0_6 = arith.constant 0 : index
    %c0_7 = arith.constant 0 : index
    %c0_8 = arith.constant 0 : index
    %c0_9 = arith.constant 0 : index
    %3 = vector.load %arg7[%c0_6, %c0_7, %c0_8, %c0_9] : memref<2x8x16x4xf32, #tpu.memory_space<vmem>>, vector<2x8x16x4xf32>
    tpu.vector_store %arg7[%c0_6, %c0_7, %c0_8, %c0_9], %2 {strides = array<i32>} : memref<2x8x16x4xf32, #tpu.memory_space<vmem>>, vector<2x8x16x4xf32>,
    %c0_10 = arith.constant 0 : index
    %c0_11 = arith.constant 0 : index
    %c0_12 = arith.constant 0 : index
    %c0_13 = arith.constant 0 : index
    %4 = tpu.strided_load %arg7[%c0_10, %c0_11, %c0_12, %c0_13] {strides = array<i32: 1, 1, 2, 1>} : memref<2x8x16x4xf32, #tpu.memory_space<vmem>>, vector<2x8x8x4xf32>
    %c0_14 = arith.constant 0 : index
    %c0_15 = arith.constant 0 : index
    %c1_16 = arith.constant 1 : index
    %c0_17 = arith.constant 0 : index
    %5 = tpu.strided_load %arg7[%c0_14, %c0_15, %c1_16, %c0_17] {strides = array<i32: 1, 1, 2, 1>} : memref<2x8x16x4xf32, #tpu.memory_space<vmem>>, vector<2x8x8x4xf32>
    %6 = arith.maximumf %4, %5 : vector<2x8x8x4xf32>
    %cst = arith.constant 0.000000e+00 : f32
    %7 = vector.broadcast %cst : f32 to vector<2x10x10x4xf32>
    %c0_18 = arith.constant 0 : index
    %c0_19 = arith.constant 0 : index
    %c0_20 = arith.constant 0 : index
    %c0_21 = arith.constant 0 : index
    %8 = vector.load %arg8[%c0_18, %c0_19, %c0_20, %c0_21] : memref<2x10x10x4xf32, #tpu.memory_space<vmem>>, vector<2x10x10x4xf32>
    tpu.vector_store %arg8[%c0_18, %c0_19, %c0_20, %c0_21], %7 {strides = array<i32>} : memref<2x10x10x4xf32, #tpu.memory_space<vmem>>, vector<2x10x10x4xf32>,
    %cst_22 = arith.constant 0.000000e+00 : f32
    %9 = vector.broadcast %cst_22 : f32 to vector<2x10x10x8xf32>
    %c0_23 = arith.constant 0 : index
    %c0_24 = arith.constant 0 : index
    %c0_25 = arith.constant 0 : index
    %c0_26 = arith.constant 0 : index
    %10 = vector.load %arg9[%c0_23, %c0_24, %c0_25, %c0_26] : memref<2x10x10x8xf32, #tpu.memory_space<vmem>>, vector<2x10x10x8xf32>
    tpu.vector_store %arg9[%c0_23, %c0_24, %c0_25, %c0_26], %9 {strides = array<i32>} : memref<2x10x10x8xf32, #tpu.memory_space<vmem>>, vector<2x10x10x8xf32>,
    %c0_27 = arith.constant 0 : index
    %c1_28 = arith.constant 1 : index
    %c1_29 = arith.constant 1 : index
    %c0_30 = arith.constant 0 : index
    %11 = vector.load %arg8[%c0_27, %c1_28, %c1_29, %c0_30] : memref<2x10x10x4xf32, #tpu.memory_space<vmem>>, vector<2x8x8x4xf32>
    tpu.vector_store %arg8[%c0_27, %c1_28, %c1_29, %c0_30], %6 {strides = array<i32>} : memref<2x10x10x4xf32, #tpu.memory_space<vmem>>, vector<2x8x8x4xf32>,
    %c0_31 = arith.constant 0 : index
    %c0_32 = arith.constant 0 : index
    %c0_33 = arith.constant 0 : index
    %c0_34 = arith.constant 0 : index
    %12 = vector.load %arg8[%c0_31, %c0_32, %c0_33, %c0_34] : memref<2x10x10x4xf32, #tpu.memory_space<vmem>>, vector<2x8x8x4xf32>
    %13 = vector.shape_cast %12 : vector<2x8x8x4xf32> to vector<128x4xf32>
    %c0_35 = arith.constant 0 : index
    %c0_36 = arith.constant 0 : index
    %c1_37 = arith.constant 1 : index
    %c0_38 = arith.constant 0 : index
    %14 = vector.load %arg8[%c0_35, %c0_36, %c1_37, %c0_38] : memref<2x10x10x4xf32, #tpu.memory_space<vmem>>, vector<2x8x8x4xf32>
    %15 = vector.shape_cast %14 : vector<2x8x8x4xf32> to vector<128x4xf32>
    %c0_39 = arith.constant 0 : index
    %c0_40 = arith.constant 0 : index
    %c2 = arith.constant 2 : index
    %c0_41 = arith.constant 0 : index
    %16 = vector.load %arg8[%c0_39, %c0_40, %c2, %c0_41] : memref<2x10x10x4xf32, #tpu.memory_space<vmem>>, vector<2x8x8x4xf32>
    %17 = vector.shape_cast %16 : vector<2x8x8x4xf32> to vector<128x4xf32>
    %c0_42 = arith.constant 0 : index
    %c1_43 = arith.constant 1 : index
    %c0_44 = arith.constant 0 : index
    %c0_45 = arith.constant 0 : index
    %18 = vector.load %arg8[%c0_42, %c1_43, %c0_44, %c0_45] : memref<2x10x10x4xf32, #tpu.memory_space<vmem>>, vector<2x8x8x4xf32>
    %19 = vector.shape_cast %18 : vector<2x8x8x4xf32> to vector<128x4xf32>
    %c0_46 = arith.constant 0 : index
    %c1_47 = arith.constant 1 : index
    %c1_48 = arith.constant 1 : index
    %c0_49 = arith.constant 0 : index
    %20 = vector.load %arg8[%c0_46, %c1_47, %c1_48, %c0_49] : memref<2x10x10x4xf32, #tpu.memory_space<vmem>>, vector<2x8x8x4xf32>
    %21 = vector.shape_cast %20 : vector<2x8x8x4xf32> to vector<128x4xf32>
    %c0_50 = arith.constant 0 : index
    %c1_51 = arith.constant 1 : index
    %c2_52 = arith.constant 2 : index
    %c0_53 = arith.constant 0 : index
    %22 = vector.load %arg8[%c0_50, %c1_51, %c2_52, %c0_53] : memref<2x10x10x4xf32, #tpu.memory_space<vmem>>, vector<2x8x8x4xf32>
    %23 = vector.shape_cast %22 : vector<2x8x8x4xf32> to vector<128x4xf32>
    %c0_54 = arith.constant 0 : index
    %c2_55 = arith.constant 2 : index
    %c0_56 = arith.constant 0 : index
    %c0_57 = arith.constant 0 : index
    %24 = vector.load %arg8[%c0_54, %c2_55, %c0_56, %c0_57] : memref<2x10x10x4xf32, #tpu.memory_space<vmem>>, vector<2x8x8x4xf32>
    %25 = vector.shape_cast %24 : vector<2x8x8x4xf32> to vector<128x4xf32>
    %c0_58 = arith.constant 0 : index
    %c2_59 = arith.constant 2 : index
    %c1_60 = arith.constant 1 : index
    %c0_61 = arith.constant 0 : index
    %26 = vector.load %arg8[%c0_58, %c2_59, %c1_60, %c0_61] : memref<2x10x10x4xf32, #tpu.memory_space<vmem>>, vector<2x8x8x4xf32>
    %27 = vector.shape_cast %26 : vector<2x8x8x4xf32> to vector<128x4xf32>
    %c0_62 = arith.constant 0 : index
    %c2_63 = arith.constant 2 : index
    %c2_64 = arith.constant 2 : index
    %c0_65 = arith.constant 0 : index
    %28 = vector.load %arg8[%c0_62, %c2_63, %c2_64, %c0_65] : memref<2x10x10x4xf32, #tpu.memory_space<vmem>>, vector<2x8x8x4xf32>
    %29 = vector.shape_cast %28 : vector<2x8x8x4xf32> to vector<128x4xf32>
    %30 = tpu.concatenate %13, %15, %17, %19, %21, %23, %25, %27, %29 in 1 : vector<128x4xf32>, vector<128x4xf32>, vector<128x4xf32>, vector<128x4xf32>, vector<128x4xf32>, vector<128x4xf32>, vector<128x4xf32>, vector<128x4xf32>, vector<128x4xf32> -> vector<128x36xf32>
    %c0_66 = arith.constant 0 : index
    %c0_67 = arith.constant 0 : index
    %31 = vector.load %arg2[%c0_66, %c0_67] : memref<36x8xf32, #tpu.memory_space<vmem>>, vector<36x8xf32>
    %cst_68 = arith.constant dense<0.000000e+00> : vector<128x8xf32>
    %32 = tpu.matmul %30, %31, %cst_68 {dimension_numbers = #tpu.dot_dimension_numbers<[1], [0], [0], [1], [0, 0, 1, 1], [], []>} : vector<128x36xf32>, vector<36x8xf32>, vector<128x8xf32> -> vector<128x8xf32>
    %c0_69 = arith.constant 0 : index
    %c0_70 = arith.constant 0 : index
    %33 = vector.load %arg3[%c0_69, %c0_70] : memref<1x8xf32, #tpu.memory_space<vmem>>, vector<1x8xf32>
    %34 = vector.broadcast %33 : vector<1x8xf32> to vector<128x8xf32>
    %35 = arith.addf %32, %34 : vector<128x8xf32>
    %cst_71 = arith.constant 0.000000e+00 : f32
    %36 = vector.broadcast %cst_71 : f32 to vector<128x8xf32>
    %37 = arith.maximumf %35, %36 : vector<128x8xf32>
    %38 = vector.shape_cast %37 : vector<128x8xf32> to vector<2x8x8x8xf32>
    %c0_72 = arith.constant 0 : index
    %c1_73 = arith.constant 1 : index
    %c1_74 = arith.constant 1 : index
    %c0_75 = arith.constant 0 : index
    %39 = vector.load %arg9[%c0_72, %c1_73, %c1_74, %c0_75] : memref<2x10x10x8xf32, #tpu.memory_space<vmem>>, vector<2x8x8x8xf32>
    tpu.vector_store %arg9[%c0_72, %c1_73, %c1_74, %c0_75], %38 {strides = array<i32>} : memref<2x10x10x8xf32, #tpu.memory_space<vmem>>, vector<2x8x8x8xf32>,
    %c0_76 = arith.constant 0 : index
    %c0_77 = arith.constant 0 : index
    %c0_78 = arith.constant 0 : index
    %c0_79 = arith.constant 0 : index
    %40 = vector.load %arg9[%c0_76, %c0_77, %c0_78, %c0_79] : memref<2x10x10x8xf32, #tpu.memory_space<vmem>>, vector<2x8x8x8xf32>
    %41 = vector.shape_cast %40 : vector<2x8x8x8xf32> to vector<128x8xf32>
    %c0_80 = arith.constant 0 : index
    %c0_81 = arith.constant 0 : index
    %c1_82 = arith.constant 1 : index
    %c0_83 = arith.constant 0 : index
    %42 = vector.load %arg9[%c0_80, %c0_81, %c1_82, %c0_83] : memref<2x10x10x8xf32, #tpu.memory_space<vmem>>, vector<2x8x8x8xf32>
    %43 = vector.shape_cast %42 : vector<2x8x8x8xf32> to vector<128x8xf32>
    %c0_84 = arith.constant 0 : index
    %c0_85 = arith.constant 0 : index
    %c2_86 = arith.constant 2 : index
    %c0_87 = arith.constant 0 : index
    %44 = vector.load %arg9[%c0_84, %c0_85, %c2_86, %c0_87] : memref<2x10x10x8xf32, #tpu.memory_space<vmem>>, vector<2x8x8x8xf32>
    %45 = vector.shape_cast %44 : vector<2x8x8x8xf32> to vector<128x8xf32>
    %c0_88 = arith.constant 0 : index
    %c1_89 = arith.constant 1 : index
    %c0_90 = arith.constant 0 : index
    %c0_91 = arith.constant 0 : index
    %46 = vector.load %arg9[%c0_88, %c1_89, %c0_90, %c0_91] : memref<2x10x10x8xf32, #tpu.memory_space<vmem>>, vector<2x8x8x8xf32>
    %47 = vector.shape_cast %46 : vector<2x8x8x8xf32> to vector<128x8xf32>
    %c0_92 = arith.constant 0 : index
    %c1_93 = arith.constant 1 : index
    %c1_94 = arith.constant 1 : index
    %c0_95 = arith.constant 0 : index
    %48 = vector.load %arg9[%c0_92, %c1_93, %c1_94, %c0_95] : memref<2x10x10x8xf32, #tpu.memory_space<vmem>>, vector<2x8x8x8xf32>
    %49 = vector.shape_cast %48 : vector<2x8x8x8xf32> to vector<128x8xf32>
    %c0_96 = arith.constant 0 : index
    %c1_97 = arith.constant 1 : index
    %c2_98 = arith.constant 2 : index
    %c0_99 = arith.constant 0 : index
    %50 = vector.load %arg9[%c0_96, %c1_97, %c2_98, %c0_99] : memref<2x10x10x8xf32, #tpu.memory_space<vmem>>, vector<2x8x8x8xf32>
    %51 = vector.shape_cast %50 : vector<2x8x8x8xf32> to vector<128x8xf32>
    %c0_100 = arith.constant 0 : index
    %c2_101 = arith.constant 2 : index
    %c0_102 = arith.constant 0 : index
    %c0_103 = arith.constant 0 : index
    %52 = vector.load %arg9[%c0_100, %c2_101, %c0_102, %c0_103] : memref<2x10x10x8xf32, #tpu.memory_space<vmem>>, vector<2x8x8x8xf32>
    %53 = vector.shape_cast %52 : vector<2x8x8x8xf32> to vector<128x8xf32>
    %c0_104 = arith.constant 0 : index
    %c2_105 = arith.constant 2 : index
    %c1_106 = arith.constant 1 : index
    %c0_107 = arith.constant 0 : index
    %54 = vector.load %arg9[%c0_104, %c2_105, %c1_106, %c0_107] : memref<2x10x10x8xf32, #tpu.memory_space<vmem>>, vector<2x8x8x8xf32>
    %55 = vector.shape_cast %54 : vector<2x8x8x8xf32> to vector<128x8xf32>
    %c0_108 = arith.constant 0 : index
    %c2_109 = arith.constant 2 : index
    %c2_110 = arith.constant 2 : index
    %c0_111 = arith.constant 0 : index
    %56 = vector.load %arg9[%c0_108, %c2_109, %c2_110, %c0_111] : memref<2x10x10x8xf32, #tpu.memory_space<vmem>>, vector<2x8x8x8xf32>
    %57 = vector.shape_cast %56 : vector<2x8x8x8xf32> to vector<128x8xf32>
    %58 = tpu.concatenate %41, %43, %45, %47, %49, %51, %53, %55, %57 in 1 : vector<128x8xf32>, vector<128x8xf32>, vector<128x8xf32>, vector<128x8xf32>, vector<128x8xf32>, vector<128x8xf32>, vector<128x8xf32>, vector<128x8xf32>, vector<128x8xf32> -> vector<128x72xf32>
    %c0_112 = arith.constant 0 : index
    %c0_113 = arith.constant 0 : index
    %59 = vector.load %arg4[%c0_112, %c0_113] : memref<72x8xf32, #tpu.memory_space<vmem>>, vector<72x8xf32>
    %cst_114 = arith.constant dense<0.000000e+00> : vector<128x8xf32>
    %60 = tpu.matmul %58, %59, %cst_114 {dimension_numbers = #tpu.dot_dimension_numbers<[1], [0], [0], [1], [0, 0, 1, 1], [], []>} : vector<128x72xf32>, vector<72x8xf32>, vector<128x8xf32> -> vector<128x8xf32>
    %c0_115 = arith.constant 0 : index
    %c0_116 = arith.constant 0 : index
    %61 = vector.load %arg5[%c0_115, %c0_116] : memref<1x8xf32, #tpu.memory_space<vmem>>, vector<1x8xf32>
    %62 = vector.broadcast %61 : vector<1x8xf32> to vector<128x8xf32>
    %63 = arith.addf %60, %62 : vector<128x8xf32>
    %cst_117 = arith.constant 0.000000e+00 : f32
    %64 = vector.broadcast %cst_117 : f32 to vector<128x8xf32>
    %65 = arith.maximumf %63, %64 : vector<128x8xf32>
    %66 = vector.shape_cast %65 : vector<128x8xf32> to vector<16x8x8xf32>
    %67 = vector.extract_strided_slice %66 {offsets = [0, 0, 0], sizes = [16, 1, 8], strides = [1, 1, 1]} : vector<16x8x8xf32> to vector<16x1x8xf32>
    %68 = vector.shape_cast %67 : vector<16x1x8xf32> to vector<16x8xf32>
    %69 = vector.extract_strided_slice %66 {offsets = [0, 1, 0], sizes = [16, 1, 8], strides = [1, 1, 1]} : vector<16x8x8xf32> to vector<16x1x8xf32>
    %70 = vector.shape_cast %69 : vector<16x1x8xf32> to vector<16x8xf32>
    %71 = vector.extract_strided_slice %66 {offsets = [0, 2, 0], sizes = [16, 1, 8], strides = [1, 1, 1]} : vector<16x8x8xf32> to vector<16x1x8xf32>
    %72 = vector.shape_cast %71 : vector<16x1x8xf32> to vector<16x8xf32>
    %73 = vector.extract_strided_slice %66 {offsets = [0, 3, 0], sizes = [16, 1, 8], strides = [1, 1, 1]} : vector<16x8x8xf32> to vector<16x1x8xf32>
    %74 = vector.shape_cast %73 : vector<16x1x8xf32> to vector<16x8xf32>
    %75 = vector.extract_strided_slice %66 {offsets = [0, 4, 0], sizes = [16, 1, 8], strides = [1, 1, 1]} : vector<16x8x8xf32> to vector<16x1x8xf32>
    %76 = vector.shape_cast %75 : vector<16x1x8xf32> to vector<16x8xf32>
    %77 = vector.extract_strided_slice %66 {offsets = [0, 5, 0], sizes = [16, 1, 8], strides = [1, 1, 1]} : vector<16x8x8xf32> to vector<16x1x8xf32>
    %78 = vector.shape_cast %77 : vector<16x1x8xf32> to vector<16x8xf32>
    %79 = vector.extract_strided_slice %66 {offsets = [0, 6, 0], sizes = [16, 1, 8], strides = [1, 1, 1]} : vector<16x8x8xf32> to vector<16x1x8xf32>
    %80 = vector.shape_cast %79 : vector<16x1x8xf32> to vector<16x8xf32>
    %81 = vector.extract_strided_slice %66 {offsets = [0, 7, 0], sizes = [16, 1, 8], strides = [1, 1, 1]} : vector<16x8x8xf32> to vector<16x1x8xf32>
    %82 = vector.shape_cast %81 : vector<16x1x8xf32> to vector<16x8xf32>
    %83 = tpu.concatenate %68, %70, %72, %74, %76, %78, %80, %82 in 1 : vector<16x8xf32>, vector<16x8xf32>, vector<16x8xf32>, vector<16x8xf32>, vector<16x8xf32>, vector<16x8xf32>, vector<16x8xf32>, vector<16x8xf32> -> vector<16x64xf32>
    %84 = vector.shape_cast %83 : vector<16x64xf32> to vector<2x8x64xf32>
    %85 = vector.extract_strided_slice %84 {offsets = [0, 0, 0], sizes = [2, 1, 64], strides = [1, 1, 1]} : vector<2x8x64xf32> to vector<2x1x64xf32>
    %86 = vector.shape_cast %85 : vector<2x1x64xf32> to vector<2x64xf32>
    %87 = vector.extract_strided_slice %84 {offsets = [0, 1, 0], sizes = [2, 1, 64], strides = [1, 1, 1]} : vector<2x8x64xf32> to vector<2x1x64xf32>
    %88 = vector.shape_cast %87 : vector<2x1x64xf32> to vector<2x64xf32>
    %89 = vector.extract_strided_slice %84 {offsets = [0, 2, 0], sizes = [2, 1, 64], strides = [1, 1, 1]} : vector<2x8x64xf32> to vector<2x1x64xf32>
    %90 = vector.shape_cast %89 : vector<2x1x64xf32> to vector<2x64xf32>
    %91 = vector.extract_strided_slice %84 {offsets = [0, 3, 0], sizes = [2, 1, 64], strides = [1, 1, 1]} : vector<2x8x64xf32> to vector<2x1x64xf32>
    %92 = vector.shape_cast %91 : vector<2x1x64xf32> to vector<2x64xf32>
    %93 = vector.extract_strided_slice %84 {offsets = [0, 4, 0], sizes = [2, 1, 64], strides = [1, 1, 1]} : vector<2x8x64xf32> to vector<2x1x64xf32>
    %94 = vector.shape_cast %93 : vector<2x1x64xf32> to vector<2x64xf32>
    %95 = vector.extract_strided_slice %84 {offsets = [0, 5, 0], sizes = [2, 1, 64], strides = [1, 1, 1]} : vector<2x8x64xf32> to vector<2x1x64xf32>
    %96 = vector.shape_cast %95 : vector<2x1x64xf32> to vector<2x64xf32>
    %97 = vector.extract_strided_slice %84 {offsets = [0, 6, 0], sizes = [2, 1, 64], strides = [1, 1, 1]} : vector<2x8x64xf32> to vector<2x1x64xf32>
    %98 = vector.shape_cast %97 : vector<2x1x64xf32> to vector<2x64xf32>
    %99 = vector.extract_strided_slice %84 {offsets = [0, 7, 0], sizes = [2, 1, 64], strides = [1, 1, 1]} : vector<2x8x64xf32> to vector<2x1x64xf32>
    %100 = vector.shape_cast %99 : vector<2x1x64xf32> to vector<2x64xf32>
    %101 = tpu.concatenate %86, %88, %90, %92, %94, %96, %98, %100 in 1 : vector<2x64xf32>, vector<2x64xf32>, vector<2x64xf32>, vector<2x64xf32>, vector<2x64xf32>, vector<2x64xf32>, vector<2x64xf32>, vector<2x64xf32> -> vector<2x512xf32>
    %c0_118 = arith.constant 0 : index
    %c0_119 = arith.constant 0 : index
    %102 = vector.load %arg6[%c0_118, %c0_119] : memref<2x512xf32, #tpu.memory_space<vmem>>, vector<2x512xf32>
    tpu.vector_store %arg6[%c0_118, %c0_119], %101 {strides = array<i32>} : memref<2x512xf32, #tpu.memory_space<vmem>>, vector<2x512xf32>,
    return
  }
  func.func @transform_0(%arg0: i32) -> (i32, i32, i32, i32) {
    %c0_i32 = arith.constant 0 : i32
    %c0_i32_0 = arith.constant 0 : i32
    %c0_i32_1 = arith.constant 0 : i32
    %c0_i32_2 = arith.constant 0 : i32
    %c0_i32_3 = arith.constant 0 : i32
    return %c0_i32, %c0_i32_0, %c0_i32_1, %c0_i32_2 : i32, i32, i32, i32
  }
  func.func @transform_1(%arg0: i32) -> (i32, i32) {
    %c0_i32 = arith.constant 0 : i32
    %c0_i32_0 = arith.constant 0 : i32
    %c0_i32_1 = arith.constant 0 : i32
    return %c0_i32, %c0_i32_0 : i32, i32
  }
  func.func @transform_2(%arg0: i32) -> (i32, i32) {
    %c0_i32 = arith.constant 0 : i32
    %c0_i32_0 = arith.constant 0 : i32
    %c0_i32_1 = arith.constant 0 : i32
    return %c0_i32, %c0_i32_0 : i32, i32
  }
  func.func @transform_3(%arg0: i32) -> (i32, i32) {
    %c0_i32 = arith.constant 0 : i32
    %c0_i32_0 = arith.constant 0 : i32
    %c0_i32_1 = arith.constant 0 : i32
    return %c0_i32, %c0_i32_0 : i32, i32
  }
  func.func @transform_4(%arg0: i32) -> (i32, i32) {
    %c0_i32 = arith.constant 0 : i32
    %c0_i32_0 = arith.constant 0 : i32
    %c0_i32_1 = arith.constant 0 : i32
    return %c0_i32, %c0_i32_0 : i32, i32
  }
  func.func @transform_5(%arg0: i32) -> (i32, i32) {
    %c0_i32 = arith.constant 0 : i32
    %c0_i32_0 = arith.constant 0 : i32
    %c0_i32_1 = arith.constant 0 : i32
    return %c0_i32, %c0_i32_0 : i32, i32
  }
}

</mosaic_0001>

<llo_original>
// kernel: downblock_forward.1
$region0: #{downblock_forward.1}
  #allocation0 [shape = 'u32[]', space=smem, size = 0x4, offset = 0x4, fixed_abs, tag = 'smem constant byte address 0x4 - core index']
  #allocation1 [shape = 'u32[72,128]{1,0:T(1,128)}', space=vmem, size = 0x9000, scoped, tag = 'internal scratch']
  #allocation2 [shape = 'f32[2,8,16,4]{3,2,1,0:T(8,128)}', space=vmem, size = 0x20000, scoped, tag = 'scratch operand']
  #allocation3 [shape = 'f32[2,10,10,4]{3,2,1,0:T(8,128)}', space=vmem, size = 0x28000, scoped, tag = 'scratch operand']
  #allocation4 [shape = 'f32[2,10,10,8]{3,2,1,0:T(8,128)}', space=vmem, size = 0x28000, scoped, tag = 'scratch operand']
  %s0 = inlined_call_operand.vmem [shape: f32[2,16,16,4], index: 0, kind: input, shape index: {}]
  %s1 = inlined_call_operand.vmem [shape: f32[36,8], index: 1, kind: input, shape index: {}]
  %s2 = inlined_call_operand.vmem [shape: f32[1,8], index: 2, kind: input, shape index: {}]
  %s3 = inlined_call_operand.vmem [shape: f32[72,8], index: 3, kind: input, shape index: {}]
  %s4 = inlined_call_operand.vmem [shape: f32[1,8], index: 4, kind: input, shape index: {}]
  %s5 = inlined_call_operand.vmem [shape: f32[2,512], index: 5, kind: output, shape index: {}]
  %s6 = sld [smem:[#allocation0]]
  $region30: #{downblock_forward.1} parent=0
    _
  %s8 = ssub.s32 1, %s6
  %s9 = scalar_select 0, %s8, %s6
  // Predicated region
  $region2: #{downblock_forward.1} parent=0 // pred_check
    _
  $region3: #{downblock_forward.1} parent=0 // pred_check_branch
    %11 = sbr.rel (0) target = $region5
  $region4: #{downblock_forward.1} parent=0 // pred_region
    _
  $region5: #{downblock_forward.1} parent=0 // pred_fallthru
    _
  // Predicated region
  $region6: #{downblock_forward.1} parent=0 // pred_check
    _
  $region7: #{downblock_forward.1} parent=0 // pred_check_branch
    %13 = sbr.rel (0) target = $region9
  $region8: #{downblock_forward.1} parent=0 // pred_region
    _
  $region9: #{downblock_forward.1} parent=0 // pred_fallthru
    _
  // Predicated region
  $region10: #{downblock_forward.1} parent=0 // pred_check
    _
  $region11: #{downblock_forward.1} parent=0 // pred_check_branch
    %15 = sbr.rel (0) target = $region13
  $region12: #{downblock_forward.1} parent=0 // pred_region
    _
  $region13: #{downblock_forward.1} parent=0 // pred_fallthru
    _
  // Predicated region
  $region14: #{downblock_forward.1} parent=0 // pred_check
    _
  $region15: #{downblock_forward.1} parent=0 // pred_check_branch
    %17 = sbr.rel (0) target = $region17
  $region16: #{downblock_forward.1} parent=0 // pred_region
    _
  $region17: #{downblock_forward.1} parent=0 // pred_fallthru
    _
  // Predicated region
  $region18: #{downblock_forward.1} parent=0 // pred_check
    _
  $region19: #{downblock_forward.1} parent=0 // pred_check_branch
    %19 = sbr.rel (0) target = $region21
  $region20: #{downblock_forward.1} parent=0 // pred_region
    _
  $region21: #{downblock_forward.1} parent=0 // pred_fallthru
    _
  %v20 = vld [vmem:[%s0] sm:$0xff]
  %v21 = vld [vmem:[%s0 + $0x8] sm:$0xff]
  %v22 = vld [vmem:[%s0 + $0x20] sm:$0xff]
  %v23 = vld [vmem:[%s0 + $0x28] sm:$0xff]
  %v24 = vld [vmem:[%s0 + $0x40] sm:$0xff]
  %v25 = vld [vmem:[%s0 + $0x48] sm:$0xff]
  %v26 = vld [vmem:[%s0 + $0x60] sm:$0xff]
  %v27 = vld [vmem:[%s0 + $0x68] sm:$0xff]
  %v28 = vld [vmem:[%s0 + $0x80] sm:$0xff]
  %v29 = vld [vmem:[%s0 + $0x88] sm:$0xff]
  %v30 = vld [vmem:[%s0 + $0xa0] sm:$0xff]
  %v31 = vld [vmem:[%s0 + $0xa8] sm:$0xff]
  %v32 = vld [vmem:[%s0 + $0xc0] sm:$0xff]
  %v33 = vld [vmem:[%s0 + $0xc8] sm:$0xff]
  %v34 = vld [vmem:[%s0 + $0xe0] sm:$0xff]
  %v35 = vld [vmem:[%s0 + $0xe8] sm:$0xff]
  %v36 = vld [vmem:[%s0 + $0x100] sm:$0xff]
  %v37 = vld [vmem:[%s0 + $0x108] sm:$0xff]
  %v38 = vld [vmem:[%s0 + $0x120] sm:$0xff]
  %v39 = vld [vmem:[%s0 + $0x128] sm:$0xff]
  %v40 = vld [vmem:[%s0 + $0x140] sm:$0xff]
  %v41 = vld [vmem:[%s0 + $0x148] sm:$0xff]
  %v42 = vld [vmem:[%s0 + $0x160] sm:$0xff]
  %v43 = vld [vmem:[%s0 + $0x168] sm:$0xff]
  %v44 = vld [vmem:[%s0 + $0x180] sm:$0xff]
  %v45 = vld [vmem:[%s0 + $0x188] sm:$0xff]
  %v46 = vld [vmem:[%s0 + $0x1a0] sm:$0xff]
  %v47 = vld [vmem:[%s0 + $0x1a8] sm:$0xff]
  %v48 = vld [vmem:[%s0 + $0x1c0] sm:$0xff]
  %v49 = vld [vmem:[%s0 + $0x1c8] sm:$0xff]
  %v50 = vld [vmem:[%s0 + $0x1e0] sm:$0xff]
  %v51 = vld [vmem:[%s0 + $0x1e8] sm:$0xff]
  %s52 = scalar_lea.vmem %s0, 16
  %v53 = vld [vmem:[%s52] sm:$0xff]
  %v54 = vld [vmem:[%s52 + $0x8] sm:$0xff]
  %v55 = vld [vmem:[%s52 + $0x20] sm:$0xff]
  %v56 = vld [vmem:[%s52 + $0x28] sm:$0xff]
  %v57 = vld [vmem:[%s52 + $0x40] sm:$0xff]
  %v58 = vld [vmem:[%s52 + $0x48] sm:$0xff]
  %v59 = vld [vmem:[%s52 + $0x60] sm:$0xff]
  %v60 = vld [vmem:[%s52 + $0x68] sm:$0xff]
  %v61 = vld [vmem:[%s52 + $0x80] sm:$0xff]
  %v62 = vld [vmem:[%s52 + $0x88] sm:$0xff]
  %v63 = vld [vmem:[%s52 + $0xa0] sm:$0xff]
  %v64 = vld [vmem:[%s52 + $0xa8] sm:$0xff]
  %v65 = vld [vmem:[%s52 + $0xc0] sm:$0xff]
  %v66 = vld [vmem:[%s52 + $0xc8] sm:$0xff]
  %v67 = vld [vmem:[%s52 + $0xe0] sm:$0xff]
  %v68 = vld [vmem:[%s52 + $0xe8] sm:$0xff]
  %v69 = vld [vmem:[%s52 + $0x100] sm:$0xff]
  %v70 = vld [vmem:[%s52 + $0x108] sm:$0xff]
  %v71 = vld [vmem:[%s52 + $0x120] sm:$0xff]
  %v72 = vld [vmem:[%s52 + $0x128] sm:$0xff]
  %v73 = vld [vmem:[%s52 + $0x140] sm:$0xff]
  %v74 = vld [vmem:[%s52 + $0x148] sm:$0xff]
  %v75 = vld [vmem:[%s52 + $0x160] sm:$0xff]
  %v76 = vld [vmem:[%s52 + $0x168] sm:$0xff]
  %v77 = vld [vmem:[%s52 + $0x180] sm:$0xff]
  %v78 = vld [vmem:[%s52 + $0x188] sm:$0xff]
  %v79 = vld [vmem:[%s52 + $0x1a0] sm:$0xff]
  %v80 = vld [vmem:[%s52 + $0x1a8] sm:$0xff]
  %v81 = vld [vmem:[%s52 + $0x1c0] sm:$0xff]
  %v82 = vld [vmem:[%s52 + $0x1c8] sm:$0xff]
  %v83 = vld [vmem:[%s52 + $0x1e0] sm:$0xff]
  %v84 = vld [vmem:[%s52 + $0x1e8] sm:$0xff]
  %v85 = vmax.f32 %v20, %v53
  %v86 = vmax.f32 %v21, %v54
  %v87 = vmax.f32 %v22, %v55
  %v88 = vmax.f32 %v23, %v56
  %v89 = vmax.f32 %v24, %v57
  %v90 = vmax.f32 %v25, %v58
  %v91 = vmax.f32 %v26, %v59
  %v92 = vmax.f32 %v27, %v60
  %v93 = vmax.f32 %v28, %v61
  %v94 = vmax.f32 %v29, %v62
  %v95 = vmax.f32 %v30, %v63
  %v96 = vmax.f32 %v31, %v64
  %v97 = vmax.f32 %v32, %v65
  %v98 = vmax.f32 %v33, %v66
  %v99 = vmax.f32 %v34, %v67
  %v100 = vmax.f32 %v35, %v68
  %v101 = vmax.f32 %v36, %v69
  %v102 = vmax.f32 %v37, %v70
  %v103 = vmax.f32 %v38, %v71
  %v104 = vmax.f32 %v39, %v72
  %v105 = vmax.f32 %v40, %v73
  %v106 = vmax.f32 %v41, %v74
  %v107 = vmax.f32 %v42, %v75
  %v108 = vmax.f32 %v43, %v76
  %v109 = vmax.f32 %v44, %v77
  %v110 = vmax.f32 %v45, %v78
  %v111 = vmax.f32 %v46, %v79
  %v112 = vmax.f32 %v47, %v80
  %v113 = vmax.f32 %v48, %v81
  %v114 = vmax.f32 %v49, %v82
  %v115 = vmax.f32 %v50, %v83
  %v116 = vmax.f32 %v51, %v84
  %vm117 = vcmask 31744
  %118 = vst.msk [vmem:[#allocation2] sm:$0xff] %vm117, %v85
  %119 = vst.msk [vmem:[#allocation2 + $0x8] sm:$0xff] %vm117, %v86
  %120 = vst.msk [vmem:[#allocation2 + $0x10] sm:$0xff] %vm117, %v87
  %121 = vst.msk [vmem:[#allocation2 + $0x18] sm:$0xff] %vm117, %v88
  %122 = vst.msk [vmem:[#allocation2 + $0x20] sm:$0xff] %vm117, %v89
  %123 = vst.msk [vmem:[#allocation2 + $0x28] sm:$0xff] %vm117, %v90
  %124 = vst.msk [vmem:[#allocation2 + $0x30] sm:$0xff] %vm117, %v91
  %125 = vst.msk [vmem:[#allocation2 + $0x38] sm:$0xff] %vm117, %v92
  %126 = vst.msk [vmem:[#allocation2 + $0x40] sm:$0xff] %vm117, %v93
  %127 = vst.msk [vmem:[#allocation2 + $0x48] sm:$0xff] %vm117, %v94
  %128 = vst.msk [vmem:[#allocation2 + $0x50] sm:$0xff] %vm117, %v95
  %129 = vst.msk [vmem:[#allocation2 + $0x58] sm:$0xff] %vm117, %v96
  %130 = vst.msk [vmem:[#allocation2 + $0x60] sm:$0xff] %vm117, %v97
  %131 = vst.msk [vmem:[#allocation2 + $0x68] sm:$0xff] %vm117, %v98
  %132 = vst.msk [vmem:[#allocation2 + $0x70] sm:$0xff] %vm117, %v99
  %133 = vst.msk [vmem:[#allocation2 + $0x78] sm:$0xff] %vm117, %v100
  %134 = vst.msk [vmem:[#allocation2 + $0x80] sm:$0xff] %vm117, %v101
  %135 = vst.msk [vmem:[#allocation2 + $0x88] sm:$0xff] %vm117, %v102
  %136 = vst.msk [vmem:[#allocation2 + $0x90] sm:$0xff] %vm117, %v103
  %137 = vst.msk [vmem:[#allocation2 + $0x98] sm:$0xff] %vm117, %v104
  %138 = vst.msk [vmem:[#allocation2 + $0xa0] sm:$0xff] %vm117, %v105
  %139 = vst.msk [vmem:[#allocation2 + $0xa8] sm:$0xff] %vm117, %v106
  %140 = vst.msk [vmem:[#allocation2 + $0xb0] sm:$0xff] %vm117, %v107
  %141 = vst.msk [vmem:[#allocation2 + $0xb8] sm:$0xff] %vm117, %v108
  %142 = vst.msk [vmem:[#allocation2 + $0xc0] sm:$0xff] %vm117, %v109
  %143 = vst.msk [vmem:[#allocation2 + $0xc8] sm:$0xff] %vm117, %v110
  %144 = vst.msk [vmem:[#allocation2 + $0xd0] sm:$0xff] %vm117, %v111
  %145 = vst.msk [vmem:[#allocation2 + $0xd8] sm:$0xff] %vm117, %v112
  %146 = vst.msk [vmem:[#allocation2 + $0xe0] sm:$0xff] %vm117, %v113
  %147 = vst.msk [vmem:[#allocation2 + $0xe8] sm:$0xff] %vm117, %v114
  %148 = vst.msk [vmem:[#allocation2 + $0xf0] sm:$0xff] %vm117, %v115
  %149 = vst.msk [vmem:[#allocation2 + $0xf8] sm:$0xff] %vm117, %v116
  %v150 = vld [vmem:[#allocation2] ss:$2 sm:$0xff]
  %s151 = scalar_lea.vmem [#allocation2], 16
  %v152 = vld [vmem:[%s151] ss:$2 sm:$0xff]
  %s153 = scalar_lea.vmem [#allocation2], 32
  %v154 = vld [vmem:[%s153] ss:$2 sm:$0xff]
  %s155 = scalar_lea.vmem [#allocation2], 48
  %v156 = vld [vmem:[%s155] ss:$2 sm:$0xff]
  %s157 = scalar_lea.vmem [#allocation2], 64
  %v158 = vld [vmem:[%s157] ss:$2 sm:$0xff]
  %s159 = scalar_lea.vmem [#allocation2], 80
  %v160 = vld [vmem:[%s159] ss:$2 sm:$0xff]
  %s161 = scalar_lea.vmem [#allocation2], 96
  %v162 = vld [vmem:[%s161] ss:$2 sm:$0xff]
  %s163 = scalar_lea.vmem [#allocation2], 112
  %v164 = vld [vmem:[%s163] ss:$2 sm:$0xff]
  %s165 = scalar_lea.vmem [#allocation2], 128
  %v166 = vld [vmem:[%s165] ss:$2 sm:$0xff]
  %s167 = scalar_lea.vmem [#allocation2], 144
  %v168 = vld [vmem:[%s167] ss:$2 sm:$0xff]
  %s169 = scalar_lea.vmem [#allocation2], 160
  %v170 = vld [vmem:[%s169] ss:$2 sm:$0xff]
  %s171 = scalar_lea.vmem [#allocation2], 176
  %v172 = vld [vmem:[%s171] ss:$2 sm:$0xff]
  %s173 = scalar_lea.vmem [#allocation2], 192
  %v174 = vld [vmem:[%s173] ss:$2 sm:$0xff]
  %s175 = scalar_lea.vmem [#allocation2], 208
  %v176 = vld [vmem:[%s175] ss:$2 sm:$0xff]
  %s177 = scalar_lea.vmem [#allocation2], 224
  %v178 = vld [vmem:[%s177] ss:$2 sm:$0xff]
  %s179 = scalar_lea.vmem [#allocation2], 240
  %v180 = vld [vmem:[%s179] ss:$2 sm:$0xff]
  %s181 = scalar_lea.vmem [#allocation2], 1
  %v182 = vld [vmem:[%s181] ss:$2 sm:$0xff]
  %s183 = scalar_lea.vmem [#allocation2], 17
  %v184 = vld [vmem:[%s183] ss:$2 sm:$0xff]
  %s185 = scalar_lea.vmem [#allocation2], 33
  %v186 = vld [vmem:[%s185] ss:$2 sm:$0xff]
  %s187 = scalar_lea.vmem [#allocation2], 49
  %v188 = vld [vmem:[%s187] ss:$2 sm:$0xff]
  %s189 = scalar_lea.vmem [#allocation2], 65
  %v190 = vld [vmem:[%s189] ss:$2 sm:$0xff]
  %s191 = scalar_lea.vmem [#allocation2], 81
  %v192 = vld [vmem:[%s191] ss:$2 sm:$0xff]
  %s193 = scalar_lea.vmem [#allocation2], 97
  %v194 = vld [vmem:[%s193] ss:$2 sm:$0xff]
  %s195 = scalar_lea.vmem [#allocation2], 113
  %v196 = vld [vmem:[%s195] ss:$2 sm:$0xff]
  %s197 = scalar_lea.vmem [#allocation2], 129
  %v198 = vld [vmem:[%s197] ss:$2 sm:$0xff]
  %s199 = scalar_lea.vmem [#allocation2], 145
  %v200 = vld [vmem:[%s199] ss:$2 sm:$0xff]
  %s201 = scalar_lea.vmem [#allocation2], 161
  %v202 = vld [vmem:[%s201] ss:$2 sm:$0xff]
  %s203 = scalar_lea.vmem [#allocation2], 177
  %v204 = vld [vmem:[%s203] ss:$2 sm:$0xff]
  %s205 = scalar_lea.vmem [#allocation2], 193
  %v206 = vld [vmem:[%s205] ss:$2 sm:$0xff]
  %s207 = scalar_lea.vmem [#allocation2], 209
  %v208 = vld [vmem:[%s207] ss:$2 sm:$0xff]
  %s209 = scalar_lea.vmem [#allocation2], 225
  %v210 = vld [vmem:[%s209] ss:$2 sm:$0xff]
  %s211 = scalar_lea.vmem [#allocation2], 241
  %v212 = vld [vmem:[%s211] ss:$2 sm:$0xff]
  %v213 = vmax.f32 %v150, %v182
  %v214 = vmax.f32 %v152, %v184
  %v215 = vmax.f32 %v154, %v186
  %v216 = vmax.f32 %v156, %v188
  %v217 = vmax.f32 %v158, %v190
  %v218 = vmax.f32 %v160, %v192
  %v219 = vmax.f32 %v162, %v194
  %v220 = vmax.f32 %v164, %v196
  %v221 = vmax.f32 %v166, %v198
  %v222 = vmax.f32 %v168, %v200
  %v223 = vmax.f32 %v170, %v202
  %v224 = vmax.f32 %v172, %v204
  %v225 = vmax.f32 %v174, %v206
  %v226 = vmax.f32 %v176, %v208
  %v227 = vmax.f32 %v178, %v210
  %v228 = vmax.f32 %v180, %v212
  %229 = vst.msk [vmem:[#allocation3] sm:$0xff] %vm117, 0.0
  %vm230 = vcmask 25600
  %231 = vst.msk [vmem:[#allocation3 + $0x8] sm:$0x3] %vm230, 0.0
  %232 = vst.msk [vmem:[#allocation3 + $0x10] sm:$0xff] %vm117, 0.0
  %233 = vst.msk [vmem:[#allocation3 + $0x18] sm:$0x3] %vm230, 0.0
  %234 = vst.msk [vmem:[#allocation3 + $0x20] sm:$0xff] %vm117, 0.0
  %235 = vst.msk [vmem:[#allocation3 + $0x28] sm:$0x3] %vm230, 0.0
  %236 = vst.msk [vmem:[#allocation3 + $0x30] sm:$0xff] %vm117, 0.0
  %237 = vst.msk [vmem:[#allocation3 + $0x38] sm:$0x3] %vm230, 0.0
  %238 = vst.msk [vmem:[#allocation3 + $0x40] sm:$0xff] %vm117, 0.0
  %239 = vst.msk [vmem:[#allocation3 + $0x48] sm:$0x3] %vm230, 0.0
  %240 = vst.msk [vmem:[#allocation3 + $0x50] sm:$0xff] %vm117, 0.0
  %241 = vst.msk [vmem:[#allocation3 + $0x58] sm:$0x3] %vm230, 0.0
  %242 = vst.msk [vmem:[#allocation3 + $0x60] sm:$0xff] %vm117, 0.0
  %243 = vst.msk [vmem:[#allocation3 + $0x68] sm:$0x3] %vm230, 0.0
  %244 = vst.msk [vmem:[#allocation3 + $0x70] sm:$0xff] %vm117, 0.0
  %245 = vst.msk [vmem:[#allocation3 + $0x78] sm:$0x3] %vm230, 0.0
  %246 = vst.msk [vmem:[#allocation3 + $0x80] sm:$0xff] %vm117, 0.0
  %247 = vst.msk [vmem:[#allocation3 + $0x88] sm:$0x3] %vm230, 0.0
  %248 = vst.msk [vmem:[#allocation3 + $0x90] sm:$0xff] %vm117, 0.0
  %249 = vst.msk [vmem:[#allocation3 + $0x98] sm:$0x3] %vm230, 0.0
  %250 = vst.msk [vmem:[#allocation3 + $0xa0] sm:$0xff] %vm117, 0.0
  %251 = vst.msk [vmem:[#allocation3 + $0xa8] sm:$0x3] %vm230, 0.0
  %252 = vst.msk [vmem:[#allocation3 + $0xb0] sm:$0xff] %vm117, 0.0
  %253 = vst.msk [vmem:[#allocation3 + $0xb8] sm:$0x3] %vm230, 0.0
  %254 = vst.msk [vmem:[#allocation3 + $0xc0] sm:$0xff] %vm117, 0.0
  %255 = vst.msk [vmem:[#allocation3 + $0xc8] sm:$0x3] %vm230, 0.0
  %256 = vst.msk [vmem:[#allocation3 + $0xd0] sm:$0xff] %vm117, 0.0
  %257 = vst.msk [vmem:[#allocation3 + $0xd8] sm:$0x3] %vm230, 0.0
  %258 = vst.msk [vmem:[#allocation3 + $0xe0] sm:$0xff] %vm117, 0.0
  %259 = vst.msk [vmem:[#allocation3 + $0xe8] sm:$0x3] %vm230, 0.0
  %260 = vst.msk [vmem:[#allocation3 + $0xf0] sm:$0xff] %vm117, 0.0
  %261 = vst.msk [vmem:[#allocation3 + $0xf8] sm:$0x3] %vm230, 0.0
  %262 = vst.msk [vmem:[#allocation3 + $0x100] sm:$0xff] %vm117, 0.0
  %263 = vst.msk [vmem:[#allocation3 + $0x108] sm:$0x3] %vm230, 0.0
  %264 = vst.msk [vmem:[#allocation3 + $0x110] sm:$0xff] %vm117, 0.0
  %265 = vst.msk [vmem:[#allocation3 + $0x118] sm:$0x3] %vm230, 0.0
  %266 = vst.msk [vmem:[#allocation3 + $0x120] sm:$0xff] %vm117, 0.0
  %267 = vst.msk [vmem:[#allocation3 + $0x128] sm:$0x3] %vm230, 0.0
  %268 = vst.msk [vmem:[#allocation3 + $0x130] sm:$0xff] %vm117, 0.0
  %269 = vst.msk [vmem:[#allocation3 + $0x138] sm:$0x3] %vm230, 0.0
  %vm270 = vcmask 64512
  %271 = vst.msk [vmem:[#allocation4] sm:$0xff] %vm270, 0.0
  %vm272 = vcmask 58368
  %273 = vst.msk [vmem:[#allocation4 + $0x8] sm:$0x3] %vm272, 0.0
  %274 = vst.msk [vmem:[#allocation4 + $0x10] sm:$0xff] %vm270, 0.0
  %275 = vst.msk [vmem:[#allocation4 + $0x18] sm:$0x3] %vm272, 0.0
  %276 = vst.msk [vmem:[#allocation4 + $0x20] sm:$0xff] %vm270, 0.0
  %277 = vst.msk [vmem:[#allocation4 + $0x28] sm:$0x3] %vm272, 0.0
  %278 = vst.msk [vmem:[#allocation4 + $0x30] sm:$0xff] %vm270, 0.0
  %279 = vst.msk [vmem:[#allocation4 + $0x38] sm:$0x3] %vm272, 0.0
  %280 = vst.msk [vmem:[#allocation4 + $0x40] sm:$0xff] %vm270, 0.0
  %281 = vst.msk [vmem:[#allocation4 + $0x48] sm:$0x3] %vm272, 0.0
  %282 = vst.msk [vmem:[#allocation4 + $0x50] sm:$0xff] %vm270, 0.0
  %283 = vst.msk [vmem:[#allocation4 + $0x58] sm:$0x3] %vm272, 0.0
  %284 = vst.msk [vmem:[#allocation4 + $0x60] sm:$0xff] %vm270, 0.0
  %285 = vst.msk [vmem:[#allocation4 + $0x68] sm:$0x3] %vm272, 0.0
  %286 = vst.msk [vmem:[#allocation4 + $0x70] sm:$0xff] %vm270, 0.0
  %287 = vst.msk [vmem:[#allocation4 + $0x78] sm:$0x3] %vm272, 0.0
  %288 = vst.msk [vmem:[#allocation4 + $0x80] sm:$0xff] %vm270, 0.0
  %289 = vst.msk [vmem:[#allocation4 + $0x88] sm:$0x3] %vm272, 0.0
  %290 = vst.msk [vmem:[#allocation4 + $0x90] sm:$0xff] %vm270, 0.0
  %291 = vst.msk [vmem:[#allocation4 + $0x98] sm:$0x3] %vm272, 0.0
  %292 = vst.msk [vmem:[#allocation4 + $0xa0] sm:$0xff] %vm270, 0.0
  %293 = vst.msk [vmem:[#allocation4 + $0xa8] sm:$0x3] %vm272, 0.0
  %294 = vst.msk [vmem:[#allocation4 + $0xb0] sm:$0xff] %vm270, 0.0
  %295 = vst.msk [vmem:[#allocation4 + $0xb8] sm:$0x3] %vm272, 0.0
  %296 = vst.msk [vmem:[#allocation4 + $0xc0] sm:$0xff] %vm270, 0.0
  %297 = vst.msk [vmem:[#allocation4 + $0xc8] sm:$0x3] %vm272, 0.0
  %298 = vst.msk [vmem:[#allocation4 + $0xd0] sm:$0xff] %vm270, 0.0
  %299 = vst.msk [vmem:[#allocation4 + $0xd8] sm:$0x3] %vm272, 0.0
  %300 = vst.msk [vmem:[#allocation4 + $0xe0] sm:$0xff] %vm270, 0.0
  %301 = vst.msk [vmem:[#allocation4 + $0xe8] sm:$0x3] %vm272, 0.0
  %302 = vst.msk [vmem:[#allocation4 + $0xf0] sm:$0xff] %vm270, 0.0
  %303 = vst.msk [vmem:[#allocation4 + $0xf8] sm:$0x3] %vm272, 0.0
  %304 = vst.msk [vmem:[#allocation4 + $0x100] sm:$0xff] %vm270, 0.0
  %305 = vst.msk [vmem:[#allocation4 + $0x108] sm:$0x3] %vm272, 0.0
  %306 = vst.msk [vmem:[#allocation4 + $0x110] sm:$0xff] %vm270, 0.0
  %307 = vst.msk [vmem:[#allocation4 + $0x118] sm:$0x3] %vm272, 0.0
  %308 = vst.msk [vmem:[#allocation4 + $0x120] sm:$0xff] %vm270, 0.0
  %309 = vst.msk [vmem:[#allocation4 + $0x128] sm:$0x3] %vm272, 0.0
  %310 = vst.msk [vmem:[#allocation4 + $0x130] sm:$0xff] %vm270, 0.0
  %311 = vst.msk [vmem:[#allocation4 + $0x138] sm:$0x3] %vm272, 0.0
  %s312 = scalar_lea.vmem [#allocation3], 16
  %313 = vst.msk [vmem:[%s312 + $0x1] sm:$0xff] %vm117, %v213
  %314 = vst.msk [vmem:[%s312 + $0x11] sm:$0xff] %vm117, %v214
  %315 = vst.msk [vmem:[%s312 + $0x21] sm:$0xff] %vm117, %v215
  %316 = vst.msk [vmem:[%s312 + $0x31] sm:$0xff] %vm117, %v216
  %317 = vst.msk [vmem:[%s312 + $0x41] sm:$0xff] %vm117, %v217
  %318 = vst.msk [vmem:[%s312 + $0x51] sm:$0xff] %vm117, %v218
  %319 = vst.msk [vmem:[%s312 + $0x61] sm:$0xff] %vm117, %v219
  %320 = vst.msk [vmem:[%s312 + $0x71] sm:$0xff] %vm117, %v220
  %321 = vst.msk [vmem:[%s312 + $0xa1] sm:$0xff] %vm117, %v221
  %322 = vst.msk [vmem:[%s312 + $0xb1] sm:$0xff] %vm117, %v222
  %323 = vst.msk [vmem:[%s312 + $0xc1] sm:$0xff] %vm117, %v223
  %324 = vst.msk [vmem:[%s312 + $0xd1] sm:$0xff] %vm117, %v224
  %325 = vst.msk [vmem:[%s312 + $0xe1] sm:$0xff] %vm117, %v225
  %326 = vst.msk [vmem:[%s312 + $0xf1] sm:$0xff] %vm117, %v226
  %327 = vst.msk [vmem:[%s312 + $0x101] sm:$0xff] %vm117, %v227
  %328 = vst.msk [vmem:[%s312 + $0x111] sm:$0xff] %vm117, %v228
  %v329 = vld [vmem:[#allocation3] sm:$0xff]
  %v330 = vld [vmem:[#allocation3 + $0x10] sm:$0xff]
  %v331 = vld [vmem:[#allocation3 + $0x20] sm:$0xff]
  %v332 = vld [vmem:[#allocation3 + $0x30] sm:$0xff]
  %v333 = vld [vmem:[#allocation3 + $0x40] sm:$0xff]
  %v334 = vld [vmem:[#allocation3 + $0x50] sm:$0xff]
  %v335 = vld [vmem:[#allocation3 + $0x60] sm:$0xff]
  %v336 = vld [vmem:[#allocation3 + $0x70] sm:$0xff]
  %v337 = vld [vmem:[#allocation3 + $0xa0] sm:$0xff]
  %v338 = vld [vmem:[#allocation3 + $0xb0] sm:$0xff]
  %v339 = vld [vmem:[#allocation3 + $0xc0] sm:$0xff]
  %v340 = vld [vmem:[#allocation3 + $0xd0] sm:$0xff]
  %v341 = vld [vmem:[#allocation3 + $0xe0] sm:$0xff]
  %v342 = vld [vmem:[#allocation3 + $0xf0] sm:$0xff]
  %v343 = vld [vmem:[#allocation3 + $0x100] sm:$0xff]
  %v344 = vld [vmem:[#allocation3 + $0x110] sm:$0xff]
  %v345 = vld [vmem:[#allocation3 + $0x1] sm:$0xff]
  %v346 = vld [vmem:[#allocation3 + $0x11] sm:$0xff]
  %v347 = vld [vmem:[#allocation3 + $0x21] sm:$0xff]
  %v348 = vld [vmem:[#allocation3 + $0x31] sm:$0xff]
  %v349 = vld [vmem:[#allocation3 + $0x41] sm:$0xff]
  %v350 = vld [vmem:[#allocation3 + $0x51] sm:$0xff]
  %v351 = vld [vmem:[#allocation3 + $0x61] sm:$0xff]
  %v352 = vld [vmem:[#allocation3 + $0x71] sm:$0xff]
  %v353 = vld [vmem:[#allocation3 + $0xa1] sm:$0xff]
  %v354 = vld [vmem:[#allocation3 + $0xb1] sm:$0xff]
  %v355 = vld [vmem:[#allocation3 + $0xc1] sm:$0xff]
  %v356 = vld [vmem:[#allocation3 + $0xd1] sm:$0xff]
  %v357 = vld [vmem:[#allocation3 + $0xe1] sm:$0xff]
  %v358 = vld [vmem:[#allocation3 + $0xf1] sm:$0xff]
  %v359 = vld [vmem:[#allocation3 + $0x101] sm:$0xff]
  %v360 = vld [vmem:[#allocation3 + $0x111] sm:$0xff]
  %v361 = vld [vmem:[#allocation3 + $0x2] sm:$0xff]
  %v362 = vld [vmem:[#allocation3 + $0x12] sm:$0xff]
  %v363 = vld [vmem:[#allocation3 + $0x22] sm:$0xff]
  %v364 = vld [vmem:[#allocation3 + $0x32] sm:$0xff]
  %v365 = vld [vmem:[#allocation3 + $0x42] sm:$0xff]
  %v366 = vld [vmem:[#allocation3 + $0x52] sm:$0xff]
  %v367 = vld [vmem:[#allocation3 + $0x62] sm:$0xff]
  %v368 = vld [vmem:[#allocation3 + $0x72] sm:$0xff]
  %v369 = vld [vmem:[#allocation3 + $0xa2] sm:$0xff]
  %v370 = vld [vmem:[#allocation3 + $0xb2] sm:$0xff]
  %v371 = vld [vmem:[#allocation3 + $0xc2] sm:$0xff]
  %v372 = vld [vmem:[#allocation3 + $0xd2] sm:$0xff]
  %v373 = vld [vmem:[#allocation3 + $0xe2] sm:$0xff]
  %v374 = vld [vmem:[#allocation3 + $0xf2] sm:$0xff]
  %v375 = vld [vmem:[#allocation3 + $0x102] sm:$0xff]
  %v376 = vld [vmem:[#allocation3 + $0x112] sm:$0xff]
  %v377 = vld [vmem:[%s312] sm:$0xff]
  %v378 = vld [vmem:[%s312 + $0x10] sm:$0xff]
  %v379 = vld [vmem:[%s312 + $0x20] sm:$0xff]
  %v380 = vld [vmem:[%s312 + $0x30] sm:$0xff]
  %v381 = vld [vmem:[%s312 + $0x40] sm:$0xff]
  %v382 = vld [vmem:[%s312 + $0x50] sm:$0xff]
  %v383 = vld [vmem:[%s312 + $0x60] sm:$0xff]
  %v384 = vld [vmem:[%s312 + $0x70] sm:$0xff]
  %v385 = vld [vmem:[%s312 + $0xa0] sm:$0xff]
  %v386 = vld [vmem:[%s312 + $0xb0] sm:$0xff]
  %v387 = vld [vmem:[%s312 + $0xc0] sm:$0xff]
  %v388 = vld [vmem:[%s312 + $0xd0] sm:$0xff]
  %v389 = vld [vmem:[%s312 + $0xe0] sm:$0xff]
  %v390 = vld [vmem:[%s312 + $0xf0] sm:$0xff]
  %v391 = vld [vmem:[%s312 + $0x100] sm:$0xff]
  %v392 = vld [vmem:[%s312 + $0x110] sm:$0xff]
  %v393 = vld [vmem:[%s312 + $0x1] sm:$0xff]
  %v394 = vld [vmem:[%s312 + $0x11] sm:$0xff]
  %v395 = vld [vmem:[%s312 + $0x21] sm:$0xff]
  %v396 = vld [vmem:[%s312 + $0x31] sm:$0xff]
  %v397 = vld [vmem:[%s312 + $0x41] sm:$0xff]
  %v398 = vld [vmem:[%s312 + $0x51] sm:$0xff]
  %v399 = vld [vmem:[%s312 + $0x61] sm:$0xff]
  %v400 = vld [vmem:[%s312 + $0x71] sm:$0xff]
  %v401 = vld [vmem:[%s312 + $0xa1] sm:$0xff]
  %v402 = vld [vmem:[%s312 + $0xb1] sm:$0xff]
  %v403 = vld [vmem:[%s312 + $0xc1] sm:$0xff]
  %v404 = vld [vmem:[%s312 + $0xd1] sm:$0xff]
  %v405 = vld [vmem:[%s312 + $0xe1] sm:$0xff]
  %v406 = vld [vmem:[%s312 + $0xf1] sm:$0xff]
  %v407 = vld [vmem:[%s312 + $0x101] sm:$0xff]
  %v408 = vld [vmem:[%s312 + $0x111] sm:$0xff]
  %v409 = vld [vmem:[%s312 + $0x2] sm:$0xff]
  %v410 = vld [vmem:[%s312 + $0x12] sm:$0xff]
  %v411 = vld [vmem:[%s312 + $0x22] sm:$0xff]
  %v412 = vld [vmem:[%s312 + $0x32] sm:$0xff]
  %v413 = vld [vmem:[%s312 + $0x42] sm:$0xff]
  %v414 = vld [vmem:[%s312 + $0x52] sm:$0xff]
  %v415 = vld [vmem:[%s312 + $0x62] sm:$0xff]
  %v416 = vld [vmem:[%s312 + $0x72] sm:$0xff]
  %v417 = vld [vmem:[%s312 + $0xa2] sm:$0xff]
  %v418 = vld [vmem:[%s312 + $0xb2] sm:$0xff]
  %v419 = vld [vmem:[%s312 + $0xc2] sm:$0xff]
  %v420 = vld [vmem:[%s312 + $0xd2] sm:$0xff]
  %v421 = vld [vmem:[%s312 + $0xe2] sm:$0xff]
  %v422 = vld [vmem:[%s312 + $0xf2] sm:$0xff]
  %v423 = vld [vmem:[%s312 + $0x102] sm:$0xff]
  %v424 = vld [vmem:[%s312 + $0x112] sm:$0xff]
  %s425 = scalar_lea.vmem [#allocation3], 32
  %v426 = vld [vmem:[%s425] sm:$0xff]
  %v427 = vld [vmem:[%s425 + $0x10] sm:$0xff]
  %v428 = vld [vmem:[%s425 + $0x20] sm:$0xff]
  %v429 = vld [vmem:[%s425 + $0x30] sm:$0xff]
  %v430 = vld [vmem:[%s425 + $0x40] sm:$0xff]
  %v431 = vld [vmem:[%s425 + $0x50] sm:$0xff]
  %v432 = vld [vmem:[%s425 + $0x60] sm:$0xff]
  %v433 = vld [vmem:[%s425 + $0x70] sm:$0xff]
  %v434 = vld [vmem:[%s425 + $0xa0] sm:$0xff]
  %v435 = vld [vmem:[%s425 + $0xb0] sm:$0xff]
  %v436 = vld [vmem:[%s425 + $0xc0] sm:$0xff]
  %v437 = vld [vmem:[%s425 + $0xd0] sm:$0xff]
  %v438 = vld [vmem:[%s425 + $0xe0] sm:$0xff]
  %v439 = vld [vmem:[%s425 + $0xf0] sm:$0xff]
  %v440 = vld [vmem:[%s425 + $0x100] sm:$0xff]
  %v441 = vld [vmem:[%s425 + $0x110] sm:$0xff]
  %v442 = vld [vmem:[%s425 + $0x1] sm:$0xff]
  %v443 = vld [vmem:[%s425 + $0x11] sm:$0xff]
  %v444 = vld [vmem:[%s425 + $0x21] sm:$0xff]
  %v445 = vld [vmem:[%s425 + $0x31] sm:$0xff]
  %v446 = vld [vmem:[%s425 + $0x41] sm:$0xff]
  %v447 = vld [vmem:[%s425 + $0x51] sm:$0xff]
  %v448 = vld [vmem:[%s425 + $0x61] sm:$0xff]
  %v449 = vld [vmem:[%s425 + $0x71] sm:$0xff]
  %v450 = vld [vmem:[%s425 + $0xa1] sm:$0xff]
  %v451 = vld [vmem:[%s425 + $0xb1] sm:$0xff]
  %v452 = vld [vmem:[%s425 + $0xc1] sm:$0xff]
  %v453 = vld [vmem:[%s425 + $0xd1] sm:$0xff]
  %v454 = vld [vmem:[%s425 + $0xe1] sm:$0xff]
  %v455 = vld [vmem:[%s425 + $0xf1] sm:$0xff]
  %v456 = vld [vmem:[%s425 + $0x101] sm:$0xff]
  %v457 = vld [vmem:[%s425 + $0x111] sm:$0xff]
  %v458 = vld [vmem:[%s425 + $0x2] sm:$0xff]
  %v459 = vld [vmem:[%s425 + $0x12] sm:$0xff]
  %v460 = vld [vmem:[%s425 + $0x22] sm:$0xff]
  %v461 = vld [vmem:[%s425 + $0x32] sm:$0xff]
  %v462 = vld [vmem:[%s425 + $0x42] sm:$0xff]
  %v463 = vld [vmem:[%s425 + $0x52] sm:$0xff]
  %v464 = vld [vmem:[%s425 + $0x62] sm:$0xff]
  %v465 = vld [vmem:[%s425 + $0x72] sm:$0xff]
  %v466 = vld [vmem:[%s425 + $0xa2] sm:$0xff]
  %v467 = vld [vmem:[%s425 + $0xb2] sm:$0xff]
  %v468 = vld [vmem:[%s425 + $0xc2] sm:$0xff]
  %v469 = vld [vmem:[%s425 + $0xd2] sm:$0xff]
  %v470 = vld [vmem:[%s425 + $0xe2] sm:$0xff]
  %v471 = vld [vmem:[%s425 + $0xf2] sm:$0xff]
  %v472 = vld [vmem:[%s425 + $0x102] sm:$0xff]
  %v473 = vld [vmem:[%s425 + $0x112] sm:$0xff]
  %490 = vrot.lane.b32.xlu0 %v345, 4
  %v491 = vpop.permute.xlu0 %490
  %492 = vrot.lane.b32.xlu0 %v346, 4
  %v493 = vpop.permute.xlu0 %492
  %494 = vrot.lane.b32.xlu0 %v347, 4
  %v495 = vpop.permute.xlu0 %494
  %496 = vrot.lane.b32.xlu0 %v348, 4
  %v497 = vpop.permute.xlu0 %496
  %498 = vrot.lane.b32.xlu0 %v349, 4
  %v499 = vpop.permute.xlu0 %498
  %500 = vrot.lane.b32.xlu0 %v350, 4
  %v501 = vpop.permute.xlu0 %500
  %502 = vrot.lane.b32.xlu0 %v351, 4
  %v503 = vpop.permute.xlu0 %502
  %504 = vrot.lane.b32.xlu0 %v352, 4
  %v505 = vpop.permute.xlu0 %504
  %506 = vrot.lane.b32.xlu0 %v353, 4
  %v507 = vpop.permute.xlu0 %506
  %508 = vrot.lane.b32.xlu0 %v354, 4
  %v509 = vpop.permute.xlu0 %508
  %510 = vrot.lane.b32.xlu0 %v355, 4
  %v511 = vpop.permute.xlu0 %510
  %512 = vrot.lane.b32.xlu0 %v356, 4
  %v513 = vpop.permute.xlu0 %512
  %514 = vrot.lane.b32.xlu0 %v357, 4
  %v515 = vpop.permute.xlu0 %514
  %516 = vrot.lane.b32.xlu0 %v358, 4
  %v517 = vpop.permute.xlu0 %516
  %518 = vrot.lane.b32.xlu0 %v359, 4
  %v519 = vpop.permute.xlu0 %518
  %520 = vrot.lane.b32.xlu0 %v360, 4
  %v521 = vpop.permute.xlu0 %520
  %554 = vrot.lane.b32.xlu0 %v361, 8
  %v555 = vpop.permute.xlu0 %554
  %556 = vrot.lane.b32.xlu0 %v362, 8
  %v557 = vpop.permute.xlu0 %556
  %558 = vrot.lane.b32.xlu0 %v363, 8
  %v559 = vpop.permute.xlu0 %558
  %560 = vrot.lane.b32.xlu0 %v364, 8
  %v561 = vpop.permute.xlu0 %560
  %562 = vrot.lane.b32.xlu0 %v365, 8
  %v563 = vpop.permute.xlu0 %562
  %564 = vrot.lane.b32.xlu0 %v366, 8
  %v565 = vpop.permute.xlu0 %564
  %566 = vrot.lane.b32.xlu0 %v367, 8
  %v567 = vpop.permute.xlu0 %566
  %568 = vrot.lane.b32.xlu0 %v368, 8
  %v569 = vpop.permute.xlu0 %568
  %570 = vrot.lane.b32.xlu0 %v369, 8
  %v571 = vpop.permute.xlu0 %570
  %572 = vrot.lane.b32.xlu0 %v370, 8
  %v573 = vpop.permute.xlu0 %572
  %574 = vrot.lane.b32.xlu0 %v371, 8
  %v575 = vpop.permute.xlu0 %574
  %576 = vrot.lane.b32.xlu0 %v372, 8
  %v577 = vpop.permute.xlu0 %576
  %578 = vrot.lane.b32.xlu0 %v373, 8
  %v579 = vpop.permute.xlu0 %578
  %580 = vrot.lane.b32.xlu0 %v374, 8
  %v581 = vpop.permute.xlu0 %580
  %582 = vrot.lane.b32.xlu0 %v375, 8
  %v583 = vpop.permute.xlu0 %582
  %584 = vrot.lane.b32.xlu0 %v376, 8
  %v585 = vpop.permute.xlu0 %584
  %618 = vrot.lane.b32.xlu0 %v377, 12
  %v619 = vpop.permute.xlu0 %618
  %620 = vrot.lane.b32.xlu0 %v378, 12
  %v621 = vpop.permute.xlu0 %620
  %622 = vrot.lane.b32.xlu0 %v379, 12
  %v623 = vpop.permute.xlu0 %622
  %624 = vrot.lane.b32.xlu0 %v380, 12
  %v625 = vpop.permute.xlu0 %624
  %626 = vrot.lane.b32.xlu0 %v381, 12
  %v627 = vpop.permute.xlu0 %626
  %628 = vrot.lane.b32.xlu0 %v382, 12
  %v629 = vpop.permute.xlu0 %628
  %630 = vrot.lane.b32.xlu0 %v383, 12
  %v631 = vpop.permute.xlu0 %630
  %632 = vrot.lane.b32.xlu0 %v384, 12
  %v633 = vpop.permute.xlu0 %632
  %634 = vrot.lane.b32.xlu0 %v385, 12
  %v635 = vpop.permute.xlu0 %634
  %636 = vrot.lane.b32.xlu0 %v386, 12
  %v637 = vpop.permute.xlu0 %636
  %638 = vrot.lane.b32.xlu0 %v387, 12
  %v639 = vpop.permute.xlu0 %638
  %640 = vrot.lane.b32.xlu0 %v388, 12
  %v641 = vpop.permute.xlu0 %640
  %642 = vrot.lane.b32.xlu0 %v389, 12
  %v643 = vpop.permute.xlu0 %642
  %644 = vrot.lane.b32.xlu0 %v390, 12
  %v645 = vpop.permute.xlu0 %644
  %646 = vrot.lane.b32.xlu0 %v391, 12
  %v647 = vpop.permute.xlu0 %646
  %648 = vrot.lane.b32.xlu0 %v392, 12
  %v649 = vpop.permute.xlu0 %648
  %682 = vrot.lane.b32.xlu0 %v393, 16
  %v683 = vpop.permute.xlu0 %682
  %684 = vrot.lane.b32.xlu0 %v394, 16
  %v685 = vpop.permute.xlu0 %684
  %686 = vrot.lane.b32.xlu0 %v395, 16
  %v687 = vpop.permute.xlu0 %686
  %688 = vrot.lane.b32.xlu0 %v396, 16
  %v689 = vpop.permute.xlu0 %688
  %690 = vrot.lane.b32.xlu0 %v397, 16
  %v691 = vpop.permute.xlu0 %690
  %692 = vrot.lane.b32.xlu0 %v398, 16
  %v693 = vpop.permute.xlu0 %692
  %694 = vrot.lane.b32.xlu0 %v399, 16
  %v695 = vpop.permute.xlu0 %694
  %696 = vrot.lane.b32.xlu0 %v400, 16
  %v697 = vpop.permute.xlu0 %696
  %698 = vrot.lane.b32.xlu0 %v401, 16
  %v699 = vpop.permute.xlu0 %698
  %700 = vrot.lane.b32.xlu0 %v402, 16
  %v701 = vpop.permute.xlu0 %700
  %702 = vrot.lane.b32.xlu0 %v403, 16
  %v703 = vpop.permute.xlu0 %702
  %704 = vrot.lane.b32.xlu0 %v404, 16
  %v705 = vpop.permute.xlu0 %704
  %706 = vrot.lane.b32.xlu0 %v405, 16
  %v707 = vpop.permute.xlu0 %706
  %708 = vrot.lane.b32.xlu0 %v406, 16
  %v709 = vpop.permute.xlu0 %708
  %710 = vrot.lane.b32.xlu0 %v407, 16
  %v711 = vpop.permute.xlu0 %710
  %712 = vrot.lane.b32.xlu0 %v408, 16
  %v713 = vpop.permute.xlu0 %712
  %746 = vrot.lane.b32.xlu0 %v409, 20
  %v747 = vpop.permute.xlu0 %746
  %748 = vrot.lane.b32.xlu0 %v410, 20
  %v749 = vpop.permute.xlu0 %748
  %750 = vrot.lane.b32.xlu0 %v411, 20
  %v751 = vpop.permute.xlu0 %750
  %752 = vrot.lane.b32.xlu0 %v412, 20
  %v753 = vpop.permute.xlu0 %752
  %754 = vrot.lane.b32.xlu0 %v413, 20
  %v755 = vpop.permute.xlu0 %754
  %756 = vrot.lane.b32.xlu0 %v414, 20
  %v757 = vpop.permute.xlu0 %756
  %758 = vrot.lane.b32.xlu0 %v415, 20
  %v759 = vpop.permute.xlu0 %758
  %760 = vrot.lane.b32.xlu0 %v416, 20
  %v761 = vpop.permute.xlu0 %760
  %762 = vrot.lane.b32.xlu0 %v417, 20
  %v763 = vpop.permute.xlu0 %762
  %764 = vrot.lane.b32.xlu0 %v418, 20
  %v765 = vpop.permute.xlu0 %764
  %766 = vrot.lane.b32.xlu0 %v419, 20
  %v767 = vpop.permute.xlu0 %766
  %768 = vrot.lane.b32.xlu0 %v420, 20
  %v769 = vpop.permute.xlu0 %768
  %770 = vrot.lane.b32.xlu0 %v421, 20
  %v771 = vpop.permute.xlu0 %770
  %772 = vrot.lane.b32.xlu0 %v422, 20
  %v773 = vpop.permute.xlu0 %772
  %774 = vrot.lane.b32.xlu0 %v423, 20
  %v775 = vpop.permute.xlu0 %774
  %776 = vrot.lane.b32.xlu0 %v424, 20
  %v777 = vpop.permute.xlu0 %776
  %810 = vrot.lane.b32.xlu0 %v426, 24
  %v811 = vpop.permute.xlu0 %810
  %812 = vrot.lane.b32.xlu0 %v427, 24
  %v813 = vpop.permute.xlu0 %812
  %814 = vrot.lane.b32.xlu0 %v428, 24
  %v815 = vpop.permute.xlu0 %814
  %816 = vrot.lane.b32.xlu0 %v429, 24
  %v817 = vpop.permute.xlu0 %816
  %818 = vrot.lane.b32.xlu0 %v430, 24
  %v819 = vpop.permute.xlu0 %818
  %820 = vrot.lane.b32.xlu0 %v431, 24
  %v821 = vpop.permute.xlu0 %820
  %822 = vrot.lane.b32.xlu0 %v432, 24
  %v823 = vpop.permute.xlu0 %822
  %824 = vrot.lane.b32.xlu0 %v433, 24
  %v825 = vpop.permute.xlu0 %824
  %826 = vrot.lane.b32.xlu0 %v434, 24
  %v827 = vpop.permute.xlu0 %826
  %828 = vrot.lane.b32.xlu0 %v435, 24
  %v829 = vpop.permute.xlu0 %828
  %830 = vrot.lane.b32.xlu0 %v436, 24
  %v831 = vpop.permute.xlu0 %830
  %832 = vrot.lane.b32.xlu0 %v437, 24
  %v833 = vpop.permute.xlu0 %832
  %834 = vrot.lane.b32.xlu0 %v438, 24
  %v835 = vpop.permute.xlu0 %834
  %836 = vrot.lane.b32.xlu0 %v439, 24
  %v837 = vpop.permute.xlu0 %836
  %838 = vrot.lane.b32.xlu0 %v440, 24
  %v839 = vpop.permute.xlu0 %838
  %840 = vrot.lane.b32.xlu0 %v441, 24
  %v841 = vpop.permute.xlu0 %840
  %874 = vrot.lane.b32.xlu0 %v442, 28
  %v875 = vpop.permute.xlu0 %874
  %876 = vrot.lane.b32.xlu0 %v443, 28
  %v877 = vpop.permute.xlu0 %876
  %878 = vrot.lane.b32.xlu0 %v444, 28
  %v879 = vpop.permute.xlu0 %878
  %880 = vrot.lane.b32.xlu0 %v445, 28
  %v881 = vpop.permute.xlu0 %880
  %882 = vrot.lane.b32.xlu0 %v446, 28
  %v883 = vpop.permute.xlu0 %882
  %884 = vrot.lane.b32.xlu0 %v447, 28
  %v885 = vpop.permute.xlu0 %884
  %886 = vrot.lane.b32.xlu0 %v448, 28
  %v887 = vpop.permute.xlu0 %886
  %888 = vrot.lane.b32.xlu0 %v449, 28
  %v889 = vpop.permute.xlu0 %888
  %890 = vrot.lane.b32.xlu0 %v450, 28
  %v891 = vpop.permute.xlu0 %890
  %892 = vrot.lane.b32.xlu0 %v451, 28
  %v893 = vpop.permute.xlu0 %892
  %894 = vrot.lane.b32.xlu0 %v452, 28
  %v895 = vpop.permute.xlu0 %894
  %896 = vrot.lane.b32.xlu0 %v453, 28
  %v897 = vpop.permute.xlu0 %896
  %898 = vrot.lane.b32.xlu0 %v454, 28
  %v899 = vpop.permute.xlu0 %898
  %900 = vrot.lane.b32.xlu0 %v455, 28
  %v901 = vpop.permute.xlu0 %900
  %902 = vrot.lane.b32.xlu0 %v456, 28
  %v903 = vpop.permute.xlu0 %902
  %904 = vrot.lane.b32.xlu0 %v457, 28
  %v905 = vpop.permute.xlu0 %904
  %938 = vrot.lane.b32.xlu0 %v458, 32
  %v939 = vpop.permute.xlu0 %938
  %940 = vrot.lane.b32.xlu0 %v459, 32
  %v941 = vpop.permute.xlu0 %940
  %942 = vrot.lane.b32.xlu0 %v460, 32
  %v943 = vpop.permute.xlu0 %942
  %944 = vrot.lane.b32.xlu0 %v461, 32
  %v945 = vpop.permute.xlu0 %944
  %946 = vrot.lane.b32.xlu0 %v462, 32
  %v947 = vpop.permute.xlu0 %946
  %948 = vrot.lane.b32.xlu0 %v463, 32
  %v949 = vpop.permute.xlu0 %948
  %950 = vrot.lane.b32.xlu0 %v464, 32
  %v951 = vpop.permute.xlu0 %950
  %952 = vrot.lane.b32.xlu0 %v465, 32
  %v953 = vpop.permute.xlu0 %952
  %954 = vrot.lane.b32.xlu0 %v466, 32
  %v955 = vpop.permute.xlu0 %954
  %956 = vrot.lane.b32.xlu0 %v467, 32
  %v957 = vpop.permute.xlu0 %956
  %958 = vrot.lane.b32.xlu0 %v468, 32
  %v959 = vpop.permute.xlu0 %958
  %960 = vrot.lane.b32.xlu0 %v469, 32
  %v961 = vpop.permute.xlu0 %960
  %962 = vrot.lane.b32.xlu0 %v470, 32
  %v963 = vpop.permute.xlu0 %962
  %964 = vrot.lane.b32.xlu0 %v471, 32
  %v965 = vpop.permute.xlu0 %964
  %966 = vrot.lane.b32.xlu0 %v472, 32
  %v967 = vpop.permute.xlu0 %966
  %968 = vrot.lane.b32.xlu0 %v473, 32
  %v969 = vpop.permute.xlu0 %968
  %v986 = vsel %vm117, %v329, %v491
  %v987 = vsel %vm117, %v330, %v493
  %v988 = vsel %vm117, %v331, %v495
  %v989 = vsel %vm117, %v332, %v497
  %v990 = vsel %vm117, %v333, %v499
  %v991 = vsel %vm117, %v334, %v501
  %v992 = vsel %vm117, %v335, %v503
  %v993 = vsel %vm117, %v336, %v505
  %v994 = vsel %vm117, %v337, %v507
  %v995 = vsel %vm117, %v338, %v509
  %v996 = vsel %vm117, %v339, %v511
  %v997 = vsel %vm117, %v340, %v513
  %v998 = vsel %vm117, %v341, %v515
  %v999 = vsel %vm117, %v342, %v517
  %v1000 = vsel %vm117, %v343, %v519
  %v1001 = vsel %vm117, %v344, %v521
  %v1002 = vsel %vm270, %v986, %v555
  %v1003 = vsel %vm270, %v987, %v557
  %v1004 = vsel %vm270, %v988, %v559
  %v1005 = vsel %vm270, %v989, %v561
  %v1006 = vsel %vm270, %v990, %v563
  %v1007 = vsel %vm270, %v991, %v565
  %v1008 = vsel %vm270, %v992, %v567
  %v1009 = vsel %vm270, %v993, %v569
  %v1010 = vsel %vm270, %v994, %v571
  %v1011 = vsel %vm270, %v995, %v573
  %v1012 = vsel %vm270, %v996, %v575
  %v1013 = vsel %vm270, %v997, %v577
  %v1014 = vsel %vm270, %v998, %v579
  %v1015 = vsel %vm270, %v999, %v581
  %v1016 = vsel %vm270, %v1000, %v583
  %v1017 = vsel %vm270, %v1001, %v585
  %vm1018 = vcmask 97280
  %v1019 = vsel %vm1018, %v1002, %v619
  %v1020 = vsel %vm1018, %v1003, %v621
  %v1021 = vsel %vm1018, %v1004, %v623
  %v1022 = vsel %vm1018, %v1005, %v625
  %v1023 = vsel %vm1018, %v1006, %v627
  %v1024 = vsel %vm1018, %v1007, %v629
  %v1025 = vsel %vm1018, %v1008, %v631
  %v1026 = vsel %vm1018, %v1009, %v633
  %v1027 = vsel %vm1018, %v1010, %v635
  %v1028 = vsel %vm1018, %v1011, %v637
  %v1029 = vsel %vm1018, %v1012, %v639
  %v1030 = vsel %vm1018, %v1013, %v641
  %v1031 = vsel %vm1018, %v1014, %v643
  %v1032 = vsel %vm1018, %v1015, %v645
  %v1033 = vsel %vm1018, %v1016, %v647
  %v1034 = vsel %vm1018, %v1017, %v649
  %vm1035 = vcmask 130048
  %v1036 = vsel %vm1035, %v1019, %v683
  %v1037 = vsel %vm1035, %v1020, %v685
  %v1038 = vsel %vm1035, %v1021, %v687
  %v1039 = vsel %vm1035, %v1022, %v689
  %v1040 = vsel %vm1035, %v1023, %v691
  %v1041 = vsel %vm1035, %v1024, %v693
  %v1042 = vsel %vm1035, %v1025, %v695
  %v1043 = vsel %vm1035, %v1026, %v697
  %v1044 = vsel %vm1035, %v1027, %v699
  %v1045 = vsel %vm1035, %v1028, %v701
  %v1046 = vsel %vm1035, %v1029, %v703
  %v1047 = vsel %vm1035, %v1030, %v705
  %v1048 = vsel %vm1035, %v1031, %v707
  %v1049 = vsel %vm1035, %v1032, %v709
  %v1050 = vsel %vm1035, %v1033, %v711
  %v1051 = vsel %vm1035, %v1034, %v713
  %vm1052 = vcmask 162816
  %v1053 = vsel %vm1052, %v1036, %v747
  %v1054 = vsel %vm1052, %v1037, %v749
  %v1055 = vsel %vm1052, %v1038, %v751
  %v1056 = vsel %vm1052, %v1039, %v753
  %v1057 = vsel %vm1052, %v1040, %v755
  %v1058 = vsel %vm1052, %v1041, %v757
  %v1059 = vsel %vm1052, %v1042, %v759
  %v1060 = vsel %vm1052, %v1043, %v761
  %v1061 = vsel %vm1052, %v1044, %v763
  %v1062 = vsel %vm1052, %v1045, %v765
  %v1063 = vsel %vm1052, %v1046, %v767
  %v1064 = vsel %vm1052, %v1047, %v769
  %v1065 = vsel %vm1052, %v1048, %v771
  %v1066 = vsel %vm1052, %v1049, %v773
  %v1067 = vsel %vm1052, %v1050, %v775
  %v1068 = vsel %vm1052, %v1051, %v777
  %vm1069 = vcmask 195584
  %v1070 = vsel %vm1069, %v1053, %v811
  %v1071 = vsel %vm1069, %v1054, %v813
  %v1072 = vsel %vm1069, %v1055, %v815
  %v1073 = vsel %vm1069, %v1056, %v817
  %v1074 = vsel %vm1069, %v1057, %v819
  %v1075 = vsel %vm1069, %v1058, %v821
  %v1076 = vsel %vm1069, %v1059, %v823
  %v1077 = vsel %vm1069, %v1060, %v825
  %v1078 = vsel %vm1069, %v1061, %v827
  %v1079 = vsel %vm1069, %v1062, %v829
  %v1080 = vsel %vm1069, %v1063, %v831
  %v1081 = vsel %vm1069, %v1064, %v833
  %v1082 = vsel %vm1069, %v1065, %v835
  %v1083 = vsel %vm1069, %v1066, %v837
  %v1084 = vsel %vm1069, %v1067, %v839
  %v1085 = vsel %vm1069, %v1068, %v841
  %vm1086 = vcmask 228352
  %v1087 = vsel %vm1086, %v1070, %v875
  %v1088 = vsel %vm1086, %v1071, %v877
  %v1089 = vsel %vm1086, %v1072, %v879
  %v1090 = vsel %vm1086, %v1073, %v881
  %v1091 = vsel %vm1086, %v1074, %v883
  %v1092 = vsel %vm1086, %v1075, %v885
  %v1093 = vsel %vm1086, %v1076, %v887
  %v1094 = vsel %vm1086, %v1077, %v889
  %v1095 = vsel %vm1086, %v1078, %v891
  %v1096 = vsel %vm1086, %v1079, %v893
  %v1097 = vsel %vm1086, %v1080, %v895
  %v1098 = vsel %vm1086, %v1081, %v897
  %v1099 = vsel %vm1086, %v1082, %v899
  %v1100 = vsel %vm1086, %v1083, %v901
  %v1101 = vsel %vm1086, %v1084, %v903
  %v1102 = vsel %vm1086, %v1085, %v905
  %vm1103 = vcmask 261120
  %v1104 = vsel %vm1103, %v1087, %v939
  %v1105 = vsel %vm1103, %v1088, %v941
  %v1106 = vsel %vm1103, %v1089, %v943
  %v1107 = vsel %vm1103, %v1090, %v945
  %v1108 = vsel %vm1103, %v1091, %v947
  %v1109 = vsel %vm1103, %v1092, %v949
  %v1110 = vsel %vm1103, %v1093, %v951
  %v1111 = vsel %vm1103, %v1094, %v953
  %v1112 = vsel %vm1103, %v1095, %v955
  %v1113 = vsel %vm1103, %v1096, %v957
  %v1114 = vsel %vm1103, %v1097, %v959
  %v1115 = vsel %vm1103, %v1098, %v961
  %v1116 = vsel %vm1103, %v1099, %v963
  %v1117 = vsel %vm1103, %v1100, %v965
  %v1118 = vsel %vm1103, %v1101, %v967
  %v1119 = vsel %vm1103, %v1102, %v969
  %v1120 = vld [vmem:[%s1] sm:$0xff]
  %v1121 = vld [vmem:[%s1 + $0x8] sm:$0xff]
  %v1122 = vld [vmem:[%s1 + $0x10] sm:$0xff]
  %v1123 = vld [vmem:[%s1 + $0x18] sm:$0xff]
  %v1124 = vld [vmem:[%s1 + $0x20] sm:$0xf]
  %v1125 = vld [vmem:[%s2] sm:$0x1]
  %v1127 = vperm.slane %v1125, 0
  %vm1129 = vcmask 293888
  %v1131 = vsel %vm1129, %v1104, 0
  %v1134 = vsel %vm1129, %v1105, 0
  %v1137 = vsel %vm1129, %v1106, 0
  %v1140 = vsel %vm1129, %v1107, 0
  %v1143 = vsel %vm1129, %v1108, 0
  %v1146 = vsel %vm1129, %v1109, 0
  %v1149 = vsel %vm1129, %v1110, 0
  %v1152 = vsel %vm1129, %v1111, 0
  %v1155 = vsel %vm1129, %v1112, 0
  %v1158 = vsel %vm1129, %v1113, 0
  %v1161 = vsel %vm1129, %v1114, 0
  %v1164 = vsel %vm1129, %v1115, 0
  %v1167 = vsel %vm1129, %v1116, 0
  %v1170 = vsel %vm1129, %v1117, 0
  %v1173 = vsel %vm1129, %v1118, 0
  %v1176 = vsel %vm1129, %v1119, 0
  %vm1178 = vcmask 1043456
  %v1180 = vsel %vm1178, %v1124, 0
  %1182 = vmatpush.msra.mxu0 0.0
  %1183 = vmatpush.msra.mxu0 0.0
  %1184 = vmatpush.msra.mxu0 0.0
  %1185 = vmatpush.msra.mxu0 0.0
  %1186 = vmatpush.msra.mxu0 0.0
  %1187 = vmatpush.msra.mxu0 0.0
  %1188 = vmatpush.msra.mxu0 0.0
  %1189 = vmatpush.msra.mxu0 0.0
  %1190 = vmatpush.msra.mxu0 0.0
  %1191 = vmatpush.msra.mxu0 0.0
  %1192 = vmatpush.msra.mxu0 0.0
  %1193 = vmatpush.msra.mxu0 %v1180
  %1194 = vmatpush.msra.mxu0 %v1123
  %1195 = vmatpush.msra.mxu0 %v1122
  %1196 = vmatpush.msra.mxu0 %v1121
  %1197 = vmatpush.msra.mxu0 %v1120
  %1198 = vmatmul.f32.gmra.mxu0 %v1131
  %v1199 = vpop.f32.mrf.mxu0
  %v1200 = vadd.f32 %v1127, %v1199
  %1201 = vmatmul.f32.gmra.mxu0 %v1134
  %v1202 = vpop.f32.mrf.mxu0
  %v1203 = vadd.f32 %v1127, %v1202
  %1204 = vmatmul.f32.gmra.mxu0 %v1137
  %v1205 = vpop.f32.mrf.mxu0
  %v1206 = vadd.f32 %v1127, %v1205
  %1207 = vmatmul.f32.gmra.mxu0 %v1140
  %v1208 = vpop.f32.mrf.mxu0
  %v1209 = vadd.f32 %v1127, %v1208
  %1210 = vmatmul.f32.gmra.mxu0 %v1143
  %v1211 = vpop.f32.mrf.mxu0
  %v1212 = vadd.f32 %v1127, %v1211
  %1213 = vmatmul.f32.gmra.mxu0 %v1146
  %v1214 = vpop.f32.mrf.mxu0
  %v1215 = vadd.f32 %v1127, %v1214
  %1216 = vmatmul.f32.gmra.mxu0 %v1149
  %v1217 = vpop.f32.mrf.mxu0
  %v1218 = vadd.f32 %v1127, %v1217
  %1219 = vmatmul.f32.gmra.mxu0 %v1152
  %v1220 = vpop.f32.mrf.mxu0
  %v1221 = vadd.f32 %v1127, %v1220
  %1222 = vmatmul.f32.gmra.mxu0 %v1155
  %v1223 = vpop.f32.mrf.mxu0
  %v1224 = vadd.f32 %v1127, %v1223
  %1225 = vmatmul.f32.gmra.mxu0 %v1158
  %v1226 = vpop.f32.mrf.mxu0
  %v1227 = vadd.f32 %v1127, %v1226
  %1228 = vmatmul.f32.gmra.mxu0 %v1161
  %v1229 = vpop.f32.mrf.mxu0
  %v1230 = vadd.f32 %v1127, %v1229
  %1231 = vmatmul.f32.gmra.mxu0 %v1164
  %v1232 = vpop.f32.mrf.mxu0
  %v1233 = vadd.f32 %v1127, %v1232
  %1234 = vmatmul.f32.gmra.mxu0 %v1167
  %v1235 = vpop.f32.mrf.mxu0
  %v1236 = vadd.f32 %v1127, %v1235
  %1237 = vmatmul.f32.gmra.mxu0 %v1170
  %v1238 = vpop.f32.mrf.mxu0
  %v1239 = vadd.f32 %v1127, %v1238
  %1240 = vmatmul.f32.gmra.mxu0 %v1173
  %v1241 = vpop.f32.mrf.mxu0
  %v1242 = vadd.f32 %v1127, %v1241
  %1243 = vmatmul.f32.gmra.mxu0 %v1176
  %v1244 = vpop.f32.mrf.mxu0
  %v1245 = vadd.f32 %v1127, %v1244
  %1246 = vdwg.mxu0
  %v1247 = vmax.f32 %v1200, 0.0
  %v1248 = vmax.f32 %v1203, 0.0
  %v1249 = vmax.f32 %v1206, 0.0
  %v1250 = vmax.f32 %v1209, 0.0
  %v1251 = vmax.f32 %v1212, 0.0
  %v1252 = vmax.f32 %v1215, 0.0
  %v1253 = vmax.f32 %v1218, 0.0
  %v1254 = vmax.f32 %v1221, 0.0
  %v1255 = vmax.f32 %v1224, 0.0
  %v1256 = vmax.f32 %v1227, 0.0
  %v1257 = vmax.f32 %v1230, 0.0
  %v1258 = vmax.f32 %v1233, 0.0
  %v1259 = vmax.f32 %v1236, 0.0
  %v1260 = vmax.f32 %v1239, 0.0
  %v1261 = vmax.f32 %v1242, 0.0
  %v1262 = vmax.f32 %v1245, 0.0
  %s1263 = scalar_lea.vmem [#allocation4], 16
  %1264 = vst.msk [vmem:[%s1263 + $0x1] sm:$0xff] %vm270, %v1247
  %1265 = vst.msk [vmem:[%s1263 + $0x11] sm:$0xff] %vm270, %v1248
  %1266 = vst.msk [vmem:[%s1263 + $0x21] sm:$0xff] %vm270, %v1249
  %1267 = vst.msk [vmem:[%s1263 + $0x31] sm:$0xff] %vm270, %v1250
  %1268 = vst.msk [vmem:[%s1263 + $0x41] sm:$0xff] %vm270, %v1251
  %1269 = vst.msk [vmem:[%s1263 + $0x51] sm:$0xff] %vm270, %v1252
  %1270 = vst.msk [vmem:[%s1263 + $0x61] sm:$0xff] %vm270, %v1253
  %1271 = vst.msk [vmem:[%s1263 + $0x71] sm:$0xff] %vm270, %v1254
  %1272 = vst.msk [vmem:[%s1263 + $0xa1] sm:$0xff] %vm270, %v1255
  %1273 = vst.msk [vmem:[%s1263 + $0xb1] sm:$0xff] %vm270, %v1256
  %1274 = vst.msk [vmem:[%s1263 + $0xc1] sm:$0xff] %vm270, %v1257
  %1275 = vst.msk [vmem:[%s1263 + $0xd1] sm:$0xff] %vm270, %v1258
  %1276 = vst.msk [vmem:[%s1263 + $0xe1] sm:$0xff] %vm270, %v1259
  %1277 = vst.msk [vmem:[%s1263 + $0xf1] sm:$0xff] %vm270, %v1260
  %1278 = vst.msk [vmem:[%s1263 + $0x101] sm:$0xff] %vm270, %v1261
  %1279 = vst.msk [vmem:[%s1263 + $0x111] sm:$0xff] %vm270, %v1262
  %v1280 = vld [vmem:[#allocation4] sm:$0xff]
  %v1281 = vld [vmem:[#allocation4 + $0x10] sm:$0xff]
  %v1282 = vld [vmem:[#allocation4 + $0x20] sm:$0xff]
  %v1283 = vld [vmem:[#allocation4 + $0x30] sm:$0xff]
  %v1284 = vld [vmem:[#allocation4 + $0x40] sm:$0xff]
  %v1285 = vld [vmem:[#allocation4 + $0x50] sm:$0xff]
  %v1286 = vld [vmem:[#allocation4 + $0x60] sm:$0xff]
  %v1287 = vld [vmem:[#allocation4 + $0x70] sm:$0xff]
  %v1288 = vld [vmem:[#allocation4 + $0xa0] sm:$0xff]
  %v1289 = vld [vmem:[#allocation4 + $0xb0] sm:$0xff]
  %v1290 = vld [vmem:[#allocation4 + $0xc0] sm:$0xff]
  %v1291 = vld [vmem:[#allocation4 + $0xd0] sm:$0xff]
  %v1292 = vld [vmem:[#allocation4 + $0xe0] sm:$0xff]
  %v1293 = vld [vmem:[#allocation4 + $0xf0] sm:$0xff]
  %v1294 = vld [vmem:[#allocation4 + $0x100] sm:$0xff]
  %v1295 = vld [vmem:[#allocation4 + $0x110] sm:$0xff]
  %v1296 = vld [vmem:[#allocation4 + $0x1] sm:$0xff]
  %v1297 = vld [vmem:[#allocation4 + $0x11] sm:$0xff]
  %v1298 = vld [vmem:[#allocation4 + $0x21] sm:$0xff]
  %v1299 = vld [vmem:[#allocation4 + $0x31] sm:$0xff]
  %v1300 = vld [vmem:[#allocation4 + $0x41] sm:$0xff]
  %v1301 = vld [vmem:[#allocation4 + $0x51] sm:$0xff]
  %v1302 = vld [vmem:[#allocation4 + $0x61] sm:$0xff]
  %v1303 = vld [vmem:[#allocation4 + $0x71] sm:$0xff]
  %v1304 = vld [vmem:[#allocation4 + $0xa1] sm:$0xff]
  %v1305 = vld [vmem:[#allocation4 + $0xb1] sm:$0xff]
  %v1306 = vld [vmem:[#allocation4 + $0xc1] sm:$0xff]
  %v1307 = vld [vmem:[#allocation4 + $0xd1] sm:$0xff]
  %v1308 = vld [vmem:[#allocation4 + $0xe1] sm:$0xff]
  %v1309 = vld [vmem:[#allocation4 + $0xf1] sm:$0xff]
  %v1310 = vld [vmem:[#allocation4 + $0x101] sm:$0xff]
  %v1311 = vld [vmem:[#allocation4 + $0x111] sm:$0xff]
  %v1312 = vld [vmem:[#allocation4 + $0x2] sm:$0xff]
  %v1313 = vld [vmem:[#allocation4 + $0x12] sm:$0xff]
  %v1314 = vld [vmem:[#allocation4 + $0x22] sm:$0xff]
  %v1315 = vld [vmem:[#allocation4 + $0x32] sm:$0xff]
  %v1316 = vld [vmem:[#allocation4 + $0x42] sm:$0xff]
  %v1317 = vld [vmem:[#allocation4 + $0x52] sm:$0xff]
  %v1318 = vld [vmem:[#allocation4 + $0x62] sm:$0xff]
  %v1319 = vld [vmem:[#allocation4 + $0x72] sm:$0xff]
  %v1320 = vld [vmem:[#allocation4 + $0xa2] sm:$0xff]
  %v1321 = vld [vmem:[#allocation4 + $0xb2] sm:$0xff]
  %v1322 = vld [vmem:[#allocation4 + $0xc2] sm:$0xff]
  %v1323 = vld [vmem:[#allocation4 + $0xd2] sm:$0xff]
  %v1324 = vld [vmem:[#allocation4 + $0xe2] sm:$0xff]
  %v1325 = vld [vmem:[#allocation4 + $0xf2] sm:$0xff]
  %v1326 = vld [vmem:[#allocation4 + $0x102] sm:$0xff]
  %v1327 = vld [vmem:[#allocation4 + $0x112] sm:$0xff]
  %v1328 = vld [vmem:[%s1263] sm:$0xff]
  %v1329 = vld [vmem:[%s1263 + $0x10] sm:$0xff]
  %v1330 = vld [vmem:[%s1263 + $0x20] sm:$0xff]
  %v1331 = vld [vmem:[%s1263 + $0x30] sm:$0xff]
  %v1332 = vld [vmem:[%s1263 + $0x40] sm:$0xff]
  %v1333 = vld [vmem:[%s1263 + $0x50] sm:$0xff]
  %v1334 = vld [vmem:[%s1263 + $0x60] sm:$0xff]
  %v1335 = vld [vmem:[%s1263 + $0x70] sm:$0xff]
  %v1336 = vld [vmem:[%s1263 + $0xa0] sm:$0xff]
  %v1337 = vld [vmem:[%s1263 + $0xb0] sm:$0xff]
  %v1338 = vld [vmem:[%s1263 + $0xc0] sm:$0xff]
  %v1339 = vld [vmem:[%s1263 + $0xd0] sm:$0xff]
  %v1340 = vld [vmem:[%s1263 + $0xe0] sm:$0xff]
  %v1341 = vld [vmem:[%s1263 + $0xf0] sm:$0xff]
  %v1342 = vld [vmem:[%s1263 + $0x100] sm:$0xff]
  %v1343 = vld [vmem:[%s1263 + $0x110] sm:$0xff]
  %v1344 = vld [vmem:[%s1263 + $0x1] sm:$0xff]
  %v1345 = vld [vmem:[%s1263 + $0x11] sm:$0xff]
  %v1346 = vld [vmem:[%s1263 + $0x21] sm:$0xff]
  %v1347 = vld [vmem:[%s1263 + $0x31] sm:$0xff]
  %v1348 = vld [vmem:[%s1263 + $0x41] sm:$0xff]
  %v1349 = vld [vmem:[%s1263 + $0x51] sm:$0xff]
  %v1350 = vld [vmem:[%s1263 + $0x61] sm:$0xff]
  %v1351 = vld [vmem:[%s1263 + $0x71] sm:$0xff]
  %v1352 = vld [vmem:[%s1263 + $0xa1] sm:$0xff]
  %v1353 = vld [vmem:[%s1263 + $0xb1] sm:$0xff]
  %v1354 = vld [vmem:[%s1263 + $0xc1] sm:$0xff]
  %v1355 = vld [vmem:[%s1263 + $0xd1] sm:$0xff]
  %v1356 = vld [vmem:[%s1263 + $0xe1] sm:$0xff]
  %v1357 = vld [vmem:[%s1263 + $0xf1] sm:$0xff]
  %v1358 = vld [vmem:[%s1263 + $0x101] sm:$0xff]
  %v1359 = vld [vmem:[%s1263 + $0x111] sm:$0xff]
  %v1360 = vld [vmem:[%s1263 + $0x2] sm:$0xff]
  %v1361 = vld [vmem:[%s1263 + $0x12] sm:$0xff]
  %v1362 = vld [vmem:[%s1263 + $0x22] sm:$0xff]
  %v1363 = vld [vmem:[%s1263 + $0x32] sm:$0xff]
  %v1364 = vld [vmem:[%s1263 + $0x42] sm:$0xff]
  %v1365 = vld [vmem:[%s1263 + $0x52] sm:$0xff]
  %v1366 = vld [vmem:[%s1263 + $0x62] sm:$0xff]
  %v1367 = vld [vmem:[%s1263 + $0x72] sm:$0xff]
  %v1368 = vld [vmem:[%s1263 + $0xa2] sm:$0xff]
  %v1369 = vld [vmem:[%s1263 + $0xb2] sm:$0xff]
  %v1370 = vld [vmem:[%s1263 + $0xc2] sm:$0xff]
  %v1371 = vld [vmem:[%s1263 + $0xd2] sm:$0xff]
  %v1372 = vld [vmem:[%s1263 + $0xe2] sm:$0xff]
  %v1373 = vld [vmem:[%s1263 + $0xf2] sm:$0xff]
  %v1374 = vld [vmem:[%s1263 + $0x102] sm:$0xff]
  %v1375 = vld [vmem:[%s1263 + $0x112] sm:$0xff]
  %s1376 = scalar_lea.vmem [#allocation4], 32
  %v1377 = vld [vmem:[%s1376] sm:$0xff]
  %v1378 = vld [vmem:[%s1376 + $0x10] sm:$0xff]
  %v1379 = vld [vmem:[%s1376 + $0x20] sm:$0xff]
  %v1380 = vld [vmem:[%s1376 + $0x30] sm:$0xff]
  %v1381 = vld [vmem:[%s1376 + $0x40] sm:$0xff]
  %v1382 = vld [vmem:[%s1376 + $0x50] sm:$0xff]
  %v1383 = vld [vmem:[%s1376 + $0x60] sm:$0xff]
  %v1384 = vld [vmem:[%s1376 + $0x70] sm:$0xff]
  %v1385 = vld [vmem:[%s1376 + $0xa0] sm:$0xff]
  %v1386 = vld [vmem:[%s1376 + $0xb0] sm:$0xff]
  %v1387 = vld [vmem:[%s1376 + $0xc0] sm:$0xff]
  %v1388 = vld [vmem:[%s1376 + $0xd0] sm:$0xff]
  %v1389 = vld [vmem:[%s1376 + $0xe0] sm:$0xff]
  %v1390 = vld [vmem:[%s1376 + $0xf0] sm:$0xff]
  %v1391 = vld [vmem:[%s1376 + $0x100] sm:$0xff]
  %v1392 = vld [vmem:[%s1376 + $0x110] sm:$0xff]
  %v1393 = vld [vmem:[%s1376 + $0x1] sm:$0xff]
  %v1394 = vld [vmem:[%s1376 + $0x11] sm:$0xff]
  %v1395 = vld [vmem:[%s1376 + $0x21] sm:$0xff]
  %v1396 = vld [vmem:[%s1376 + $0x31] sm:$0xff]
  %v1397 = vld [vmem:[%s1376 + $0x41] sm:$0xff]
  %v1398 = vld [vmem:[%s1376 + $0x51] sm:$0xff]
  %v1399 = vld [vmem:[%s1376 + $0x61] sm:$0xff]
  %v1400 = vld [vmem:[%s1376 + $0x71] sm:$0xff]
  %v1401 = vld [vmem:[%s1376 + $0xa1] sm:$0xff]
  %v1402 = vld [vmem:[%s1376 + $0xb1] sm:$0xff]
  %v1403 = vld [vmem:[%s1376 + $0xc1] sm:$0xff]
  %v1404 = vld [vmem:[%s1376 + $0xd1] sm:$0xff]
  %v1405 = vld [vmem:[%s1376 + $0xe1] sm:$0xff]
  %v1406 = vld [vmem:[%s1376 + $0xf1] sm:$0xff]
  %v1407 = vld [vmem:[%s1376 + $0x101] sm:$0xff]
  %v1408 = vld [vmem:[%s1376 + $0x111] sm:$0xff]
  %v1409 = vld [vmem:[%s1376 + $0x2] sm:$0xff]
  %v1410 = vld [vmem:[%s1376 + $0x12] sm:$0xff]
  %v1411 = vld [vmem:[%s1376 + $0x22] sm:$0xff]
  %v1412 = vld [vmem:[%s1376 + $0x32] sm:$0xff]
  %v1413 = vld [vmem:[%s1376 + $0x42] sm:$0xff]
  %v1414 = vld [vmem:[%s1376 + $0x52] sm:$0xff]
  %v1415 = vld [vmem:[%s1376 + $0x62] sm:$0xff]
  %v1416 = vld [vmem:[%s1376 + $0x72] sm:$0xff]
  %v1417 = vld [vmem:[%s1376 + $0xa2] sm:$0xff]
  %v1418 = vld [vmem:[%s1376 + $0xb2] sm:$0xff]
  %v1419 = vld [vmem:[%s1376 + $0xc2] sm:$0xff]
  %v1420 = vld [vmem:[%s1376 + $0xd2] sm:$0xff]
  %v1421 = vld [vmem:[%s1376 + $0xe2] sm:$0xff]
  %v1422 = vld [vmem:[%s1376 + $0xf2] sm:$0xff]
  %v1423 = vld [vmem:[%s1376 + $0x102] sm:$0xff]
  %v1424 = vld [vmem:[%s1376 + $0x112] sm:$0xff]
  %1441 = vrot.lane.b32.xlu0 %v1296, 8
  %v1442 = vpop.permute.xlu0 %1441
  %1443 = vrot.lane.b32.xlu0 %v1297, 8
  %v1444 = vpop.permute.xlu0 %1443
  %1445 = vrot.lane.b32.xlu0 %v1298, 8
  %v1446 = vpop.permute.xlu0 %1445
  %1447 = vrot.lane.b32.xlu0 %v1299, 8
  %v1448 = vpop.permute.xlu0 %1447
  %1449 = vrot.lane.b32.xlu0 %v1300, 8
  %v1450 = vpop.permute.xlu0 %1449
  %1451 = vrot.lane.b32.xlu0 %v1301, 8
  %v1452 = vpop.permute.xlu0 %1451
  %1453 = vrot.lane.b32.xlu0 %v1302, 8
  %v1454 = vpop.permute.xlu0 %1453
  %1455 = vrot.lane.b32.xlu0 %v1303, 8
  %v1456 = vpop.permute.xlu0 %1455
  %1457 = vrot.lane.b32.xlu0 %v1304, 8
  %v1458 = vpop.permute.xlu0 %1457
  %1459 = vrot.lane.b32.xlu0 %v1305, 8
  %v1460 = vpop.permute.xlu0 %1459
  %1461 = vrot.lane.b32.xlu0 %v1306, 8
  %v1462 = vpop.permute.xlu0 %1461
  %1463 = vrot.lane.b32.xlu0 %v1307, 8
  %v1464 = vpop.permute.xlu0 %1463
  %1465 = vrot.lane.b32.xlu0 %v1308, 8
  %v1466 = vpop.permute.xlu0 %1465
  %1467 = vrot.lane.b32.xlu0 %v1309, 8
  %v1468 = vpop.permute.xlu0 %1467
  %1469 = vrot.lane.b32.xlu0 %v1310, 8
  %v1470 = vpop.permute.xlu0 %1469
  %1471 = vrot.lane.b32.xlu0 %v1311, 8
  %v1472 = vpop.permute.xlu0 %1471
  %1505 = vrot.lane.b32.xlu0 %v1312, 16
  %v1506 = vpop.permute.xlu0 %1505
  %1507 = vrot.lane.b32.xlu0 %v1313, 16
  %v1508 = vpop.permute.xlu0 %1507
  %1509 = vrot.lane.b32.xlu0 %v1314, 16
  %v1510 = vpop.permute.xlu0 %1509
  %1511 = vrot.lane.b32.xlu0 %v1315, 16
  %v1512 = vpop.permute.xlu0 %1511
  %1513 = vrot.lane.b32.xlu0 %v1316, 16
  %v1514 = vpop.permute.xlu0 %1513
  %1515 = vrot.lane.b32.xlu0 %v1317, 16
  %v1516 = vpop.permute.xlu0 %1515
  %1517 = vrot.lane.b32.xlu0 %v1318, 16
  %v1518 = vpop.permute.xlu0 %1517
  %1519 = vrot.lane.b32.xlu0 %v1319, 16
  %v1520 = vpop.permute.xlu0 %1519
  %1521 = vrot.lane.b32.xlu0 %v1320, 16
  %v1522 = vpop.permute.xlu0 %1521
  %1523 = vrot.lane.b32.xlu0 %v1321, 16
  %v1524 = vpop.permute.xlu0 %1523
  %1525 = vrot.lane.b32.xlu0 %v1322, 16
  %v1526 = vpop.permute.xlu0 %1525
  %1527 = vrot.lane.b32.xlu0 %v1323, 16
  %v1528 = vpop.permute.xlu0 %1527
  %1529 = vrot.lane.b32.xlu0 %v1324, 16
  %v1530 = vpop.permute.xlu0 %1529
  %1531 = vrot.lane.b32.xlu0 %v1325, 16
  %v1532 = vpop.permute.xlu0 %1531
  %1533 = vrot.lane.b32.xlu0 %v1326, 16
  %v1534 = vpop.permute.xlu0 %1533
  %1535 = vrot.lane.b32.xlu0 %v1327, 16
  %v1536 = vpop.permute.xlu0 %1535
  %1569 = vrot.lane.b32.xlu0 %v1328, 24
  %v1570 = vpop.permute.xlu0 %1569
  %1571 = vrot.lane.b32.xlu0 %v1329, 24
  %v1572 = vpop.permute.xlu0 %1571
  %1573 = vrot.lane.b32.xlu0 %v1330, 24
  %v1574 = vpop.permute.xlu0 %1573
  %1575 = vrot.lane.b32.xlu0 %v1331, 24
  %v1576 = vpop.permute.xlu0 %1575
  %1577 = vrot.lane.b32.xlu0 %v1332, 24
  %v1578 = vpop.permute.xlu0 %1577
  %1579 = vrot.lane.b32.xlu0 %v1333, 24
  %v1580 = vpop.permute.xlu0 %1579
  %1581 = vrot.lane.b32.xlu0 %v1334, 24
  %v1582 = vpop.permute.xlu0 %1581
  %1583 = vrot.lane.b32.xlu0 %v1335, 24
  %v1584 = vpop.permute.xlu0 %1583
  %1585 = vrot.lane.b32.xlu0 %v1336, 24
  %v1586 = vpop.permute.xlu0 %1585
  %1587 = vrot.lane.b32.xlu0 %v1337, 24
  %v1588 = vpop.permute.xlu0 %1587
  %1589 = vrot.lane.b32.xlu0 %v1338, 24
  %v1590 = vpop.permute.xlu0 %1589
  %1591 = vrot.lane.b32.xlu0 %v1339, 24
  %v1592 = vpop.permute.xlu0 %1591
  %1593 = vrot.lane.b32.xlu0 %v1340, 24
  %v1594 = vpop.permute.xlu0 %1593
  %1595 = vrot.lane.b32.xlu0 %v1341, 24
  %v1596 = vpop.permute.xlu0 %1595
  %1597 = vrot.lane.b32.xlu0 %v1342, 24
  %v1598 = vpop.permute.xlu0 %1597
  %1599 = vrot.lane.b32.xlu0 %v1343, 24
  %v1600 = vpop.permute.xlu0 %1599
  %1633 = vrot.lane.b32.xlu0 %v1344, 32
  %v1634 = vpop.permute.xlu0 %1633
  %1635 = vrot.lane.b32.xlu0 %v1345, 32
  %v1636 = vpop.permute.xlu0 %1635
  %1637 = vrot.lane.b32.xlu0 %v1346, 32
  %v1638 = vpop.permute.xlu0 %1637
  %1639 = vrot.lane.b32.xlu0 %v1347, 32
  %v1640 = vpop.permute.xlu0 %1639
  %1641 = vrot.lane.b32.xlu0 %v1348, 32
  %v1642 = vpop.permute.xlu0 %1641
  %1643 = vrot.lane.b32.xlu0 %v1349, 32
  %v1644 = vpop.permute.xlu0 %1643
  %1645 = vrot.lane.b32.xlu0 %v1350, 32
  %v1646 = vpop.permute.xlu0 %1645
  %1647 = vrot.lane.b32.xlu0 %v1351, 32
  %v1648 = vpop.permute.xlu0 %1647
  %1649 = vrot.lane.b32.xlu0 %v1352, 32
  %v1650 = vpop.permute.xlu0 %1649
  %1651 = vrot.lane.b32.xlu0 %v1353, 32
  %v1652 = vpop.permute.xlu0 %1651
  %1653 = vrot.lane.b32.xlu0 %v1354, 32
  %v1654 = vpop.permute.xlu0 %1653
  %1655 = vrot.lane.b32.xlu0 %v1355, 32
  %v1656 = vpop.permute.xlu0 %1655
  %1657 = vrot.lane.b32.xlu0 %v1356, 32
  %v1658 = vpop.permute.xlu0 %1657
  %1659 = vrot.lane.b32.xlu0 %v1357, 32
  %v1660 = vpop.permute.xlu0 %1659
  %1661 = vrot.lane.b32.xlu0 %v1358, 32
  %v1662 = vpop.permute.xlu0 %1661
  %1663 = vrot.lane.b32.xlu0 %v1359, 32
  %v1664 = vpop.permute.xlu0 %1663
  %1697 = vrot.lane.b32.xlu0 %v1360, 40
  %v1698 = vpop.permute.xlu0 %1697
  %1699 = vrot.lane.b32.xlu0 %v1361, 40
  %v1700 = vpop.permute.xlu0 %1699
  %1701 = vrot.lane.b32.xlu0 %v1362, 40
  %v1702 = vpop.permute.xlu0 %1701
  %1703 = vrot.lane.b32.xlu0 %v1363, 40
  %v1704 = vpop.permute.xlu0 %1703
  %1705 = vrot.lane.b32.xlu0 %v1364, 40
  %v1706 = vpop.permute.xlu0 %1705
  %1707 = vrot.lane.b32.xlu0 %v1365, 40
  %v1708 = vpop.permute.xlu0 %1707
  %1709 = vrot.lane.b32.xlu0 %v1366, 40
  %v1710 = vpop.permute.xlu0 %1709
  %1711 = vrot.lane.b32.xlu0 %v1367, 40
  %v1712 = vpop.permute.xlu0 %1711
  %1713 = vrot.lane.b32.xlu0 %v1368, 40
  %v1714 = vpop.permute.xlu0 %1713
  %1715 = vrot.lane.b32.xlu0 %v1369, 40
  %v1716 = vpop.permute.xlu0 %1715
  %1717 = vrot.lane.b32.xlu0 %v1370, 40
  %v1718 = vpop.permute.xlu0 %1717
  %1719 = vrot.lane.b32.xlu0 %v1371, 40
  %v1720 = vpop.permute.xlu0 %1719
  %1721 = vrot.lane.b32.xlu0 %v1372, 40
  %v1722 = vpop.permute.xlu0 %1721
  %1723 = vrot.lane.b32.xlu0 %v1373, 40
  %v1724 = vpop.permute.xlu0 %1723
  %1725 = vrot.lane.b32.xlu0 %v1374, 40
  %v1726 = vpop.permute.xlu0 %1725
  %1727 = vrot.lane.b32.xlu0 %v1375, 40
  %v1728 = vpop.permute.xlu0 %1727
  %1761 = vrot.lane.b32.xlu0 %v1377, 48
  %v1762 = vpop.permute.xlu0 %1761
  %1763 = vrot.lane.b32.xlu0 %v1378, 48
  %v1764 = vpop.permute.xlu0 %1763
  %1765 = vrot.lane.b32.xlu0 %v1379, 48
  %v1766 = vpop.permute.xlu0 %1765
  %1767 = vrot.lane.b32.xlu0 %v1380, 48
  %v1768 = vpop.permute.xlu0 %1767
  %1769 = vrot.lane.b32.xlu0 %v1381, 48
  %v1770 = vpop.permute.xlu0 %1769
  %1771 = vrot.lane.b32.xlu0 %v1382, 48
  %v1772 = vpop.permute.xlu0 %1771
  %1773 = vrot.lane.b32.xlu0 %v1383, 48
  %v1774 = vpop.permute.xlu0 %1773
  %1775 = vrot.lane.b32.xlu0 %v1384, 48
  %v1776 = vpop.permute.xlu0 %1775
  %1777 = vrot.lane.b32.xlu0 %v1385, 48
  %v1778 = vpop.permute.xlu0 %1777
  %1779 = vrot.lane.b32.xlu0 %v1386, 48
  %v1780 = vpop.permute.xlu0 %1779
  %1781 = vrot.lane.b32.xlu0 %v1387, 48
  %v1782 = vpop.permute.xlu0 %1781
  %1783 = vrot.lane.b32.xlu0 %v1388, 48
  %v1784 = vpop.permute.xlu0 %1783
  %1785 = vrot.lane.b32.xlu0 %v1389, 48
  %v1786 = vpop.permute.xlu0 %1785
  %1787 = vrot.lane.b32.xlu0 %v1390, 48
  %v1788 = vpop.permute.xlu0 %1787
  %1789 = vrot.lane.b32.xlu0 %v1391, 48
  %v1790 = vpop.permute.xlu0 %1789
  %1791 = vrot.lane.b32.xlu0 %v1392, 48
  %v1792 = vpop.permute.xlu0 %1791
  %1825 = vrot.lane.b32.xlu0 %v1393, 56
  %v1826 = vpop.permute.xlu0 %1825
  %1827 = vrot.lane.b32.xlu0 %v1394, 56
  %v1828 = vpop.permute.xlu0 %1827
  %1829 = vrot.lane.b32.xlu0 %v1395, 56
  %v1830 = vpop.permute.xlu0 %1829
  %1831 = vrot.lane.b32.xlu0 %v1396, 56
  %v1832 = vpop.permute.xlu0 %1831
  %1833 = vrot.lane.b32.xlu0 %v1397, 56
  %v1834 = vpop.permute.xlu0 %1833
  %1835 = vrot.lane.b32.xlu0 %v1398, 56
  %v1836 = vpop.permute.xlu0 %1835
  %1837 = vrot.lane.b32.xlu0 %v1399, 56
  %v1838 = vpop.permute.xlu0 %1837
  %1839 = vrot.lane.b32.xlu0 %v1400, 56
  %v1840 = vpop.permute.xlu0 %1839
  %1841 = vrot.lane.b32.xlu0 %v1401, 56
  %v1842 = vpop.permute.xlu0 %1841
  %1843 = vrot.lane.b32.xlu0 %v1402, 56
  %v1844 = vpop.permute.xlu0 %1843
  %1845 = vrot.lane.b32.xlu0 %v1403, 56
  %v1846 = vpop.permute.xlu0 %1845
  %1847 = vrot.lane.b32.xlu0 %v1404, 56
  %v1848 = vpop.permute.xlu0 %1847
  %1849 = vrot.lane.b32.xlu0 %v1405, 56
  %v1850 = vpop.permute.xlu0 %1849
  %1851 = vrot.lane.b32.xlu0 %v1406, 56
  %v1852 = vpop.permute.xlu0 %1851
  %1853 = vrot.lane.b32.xlu0 %v1407, 56
  %v1854 = vpop.permute.xlu0 %1853
  %1855 = vrot.lane.b32.xlu0 %v1408, 56
  %v1856 = vpop.permute.xlu0 %1855
  %1889 = vrot.lane.b32.xlu0 %v1409, 64
  %v1890 = vpop.permute.xlu0 %1889
  %1891 = vrot.lane.b32.xlu0 %v1410, 64
  %v1892 = vpop.permute.xlu0 %1891
  %1893 = vrot.lane.b32.xlu0 %v1411, 64
  %v1894 = vpop.permute.xlu0 %1893
  %1895 = vrot.lane.b32.xlu0 %v1412, 64
  %v1896 = vpop.permute.xlu0 %1895
  %1897 = vrot.lane.b32.xlu0 %v1413, 64
  %v1898 = vpop.permute.xlu0 %1897
  %1899 = vrot.lane.b32.xlu0 %v1414, 64
  %v1900 = vpop.permute.xlu0 %1899
  %1901 = vrot.lane.b32.xlu0 %v1415, 64
  %v1902 = vpop.permute.xlu0 %1901
  %1903 = vrot.lane.b32.xlu0 %v1416, 64
  %v1904 = vpop.permute.xlu0 %1903
  %1905 = vrot.lane.b32.xlu0 %v1417, 64
  %v1906 = vpop.permute.xlu0 %1905
  %1907 = vrot.lane.b32.xlu0 %v1418, 64
  %v1908 = vpop.permute.xlu0 %1907
  %1909 = vrot.lane.b32.xlu0 %v1419, 64
  %v1910 = vpop.permute.xlu0 %1909
  %1911 = vrot.lane.b32.xlu0 %v1420, 64
  %v1912 = vpop.permute.xlu0 %1911
  %1913 = vrot.lane.b32.xlu0 %v1421, 64
  %v1914 = vpop.permute.xlu0 %1913
  %1915 = vrot.lane.b32.xlu0 %v1422, 64
  %v1916 = vpop.permute.xlu0 %1915
  %1917 = vrot.lane.b32.xlu0 %v1423, 64
  %v1918 = vpop.permute.xlu0 %1917
  %1919 = vrot.lane.b32.xlu0 %v1424, 64
  %v1920 = vpop.permute.xlu0 %1919
  %v1937 = vsel %vm270, %v1280, %v1442
  %v1938 = vsel %vm270, %v1281, %v1444
  %v1939 = vsel %vm270, %v1282, %v1446
  %v1940 = vsel %vm270, %v1283, %v1448
  %v1941 = vsel %vm270, %v1284, %v1450
  %v1942 = vsel %vm270, %v1285, %v1452
  %v1943 = vsel %vm270, %v1286, %v1454
  %v1944 = vsel %vm270, %v1287, %v1456
  %v1945 = vsel %vm270, %v1288, %v1458
  %v1946 = vsel %vm270, %v1289, %v1460
  %v1947 = vsel %vm270, %v1290, %v1462
  %v1948 = vsel %vm270, %v1291, %v1464
  %v1949 = vsel %vm270, %v1292, %v1466
  %v1950 = vsel %vm270, %v1293, %v1468
  %v1951 = vsel %vm270, %v1294, %v1470
  %v1952 = vsel %vm270, %v1295, %v1472
  %v1953 = vsel %vm1035, %v1937, %v1506
  %v1954 = vsel %vm1035, %v1938, %v1508
  %v1955 = vsel %vm1035, %v1939, %v1510
  %v1956 = vsel %vm1035, %v1940, %v1512
  %v1957 = vsel %vm1035, %v1941, %v1514
  %v1958 = vsel %vm1035, %v1942, %v1516
  %v1959 = vsel %vm1035, %v1943, %v1518
  %v1960 = vsel %vm1035, %v1944, %v1520
  %v1961 = vsel %vm1035, %v1945, %v1522
  %v1962 = vsel %vm1035, %v1946, %v1524
  %v1963 = vsel %vm1035, %v1947, %v1526
  %v1964 = vsel %vm1035, %v1948, %v1528
  %v1965 = vsel %vm1035, %v1949, %v1530
  %v1966 = vsel %vm1035, %v1950, %v1532
  %v1967 = vsel %vm1035, %v1951, %v1534
  %v1968 = vsel %vm1035, %v1952, %v1536
  %v1969 = vsel %vm1069, %v1953, %v1570
  %v1970 = vsel %vm1069, %v1954, %v1572
  %v1971 = vsel %vm1069, %v1955, %v1574
  %v1972 = vsel %vm1069, %v1956, %v1576
  %v1973 = vsel %vm1069, %v1957, %v1578
  %v1974 = vsel %vm1069, %v1958, %v1580
  %v1975 = vsel %vm1069, %v1959, %v1582
  %v1976 = vsel %vm1069, %v1960, %v1584
  %v1977 = vsel %vm1069, %v1961, %v1586
  %v1978 = vsel %vm1069, %v1962, %v1588
  %v1979 = vsel %vm1069, %v1963, %v1590
  %v1980 = vsel %vm1069, %v1964, %v1592
  %v1981 = vsel %vm1069, %v1965, %v1594
  %v1982 = vsel %vm1069, %v1966, %v1596
  %v1983 = vsel %vm1069, %v1967, %v1598
  %v1984 = vsel %vm1069, %v1968, %v1600
  %v1985 = vsel %vm1103, %v1969, %v1634
  %v1986 = vsel %vm1103, %v1970, %v1636
  %v1987 = vsel %vm1103, %v1971, %v1638
  %v1988 = vsel %vm1103, %v1972, %v1640
  %v1989 = vsel %vm1103, %v1973, %v1642
  %v1990 = vsel %vm1103, %v1974, %v1644
  %v1991 = vsel %vm1103, %v1975, %v1646
  %v1992 = vsel %vm1103, %v1976, %v1648
  %v1993 = vsel %vm1103, %v1977, %v1650
  %v1994 = vsel %vm1103, %v1978, %v1652
  %v1995 = vsel %vm1103, %v1979, %v1654
  %v1996 = vsel %vm1103, %v1980, %v1656
  %v1997 = vsel %vm1103, %v1981, %v1658
  %v1998 = vsel %vm1103, %v1982, %v1660
  %v1999 = vsel %vm1103, %v1983, %v1662
  %v2000 = vsel %vm1103, %v1984, %v1664
  %vm2001 = vcmask 326656
  %v2002 = vsel %vm2001, %v1985, %v1698
  %v2003 = vsel %vm2001, %v1986, %v1700
  %v2004 = vsel %vm2001, %v1987, %v1702
  %v2005 = vsel %vm2001, %v1988, %v1704
  %v2006 = vsel %vm2001, %v1989, %v1706
  %v2007 = vsel %vm2001, %v1990, %v1708
  %v2008 = vsel %vm2001, %v1991, %v1710
  %v2009 = vsel %vm2001, %v1992, %v1712
  %v2010 = vsel %vm2001, %v1993, %v1714
  %v2011 = vsel %vm2001, %v1994, %v1716
  %v2012 = vsel %vm2001, %v1995, %v1718
  %v2013 = vsel %vm2001, %v1996, %v1720
  %v2014 = vsel %vm2001, %v1997, %v1722
  %v2015 = vsel %vm2001, %v1998, %v1724
  %v2016 = vsel %vm2001, %v1999, %v1726
  %v2017 = vsel %vm2001, %v2000, %v1728
  %vm2018 = vcmask 392192
  %v2019 = vsel %vm2018, %v2002, %v1762
  %v2020 = vsel %vm2018, %v2003, %v1764
  %v2021 = vsel %vm2018, %v2004, %v1766
  %v2022 = vsel %vm2018, %v2005, %v1768
  %v2023 = vsel %vm2018, %v2006, %v1770
  %v2024 = vsel %vm2018, %v2007, %v1772
  %v2025 = vsel %vm2018, %v2008, %v1774
  %v2026 = vsel %vm2018, %v2009, %v1776
  %v2027 = vsel %vm2018, %v2010, %v1778
  %v2028 = vsel %vm2018, %v2011, %v1780
  %v2029 = vsel %vm2018, %v2012, %v1782
  %v2030 = vsel %vm2018, %v2013, %v1784
  %v2031 = vsel %vm2018, %v2014, %v1786
  %v2032 = vsel %vm2018, %v2015, %v1788
  %v2033 = vsel %vm2018, %v2016, %v1790
  %v2034 = vsel %vm2018, %v2017, %v1792
  %vm2035 = vcmask 457728
  %v2036 = vsel %vm2035, %v2019, %v1826
  %v2037 = vsel %vm2035, %v2020, %v1828
  %v2038 = vsel %vm2035, %v2021, %v1830
  %v2039 = vsel %vm2035, %v2022, %v1832
  %v2040 = vsel %vm2035, %v2023, %v1834
  %v2041 = vsel %vm2035, %v2024, %v1836
  %v2042 = vsel %vm2035, %v2025, %v1838
  %v2043 = vsel %vm2035, %v2026, %v1840
  %v2044 = vsel %vm2035, %v2027, %v1842
  %v2045 = vsel %vm2035, %v2028, %v1844
  %v2046 = vsel %vm2035, %v2029, %v1846
  %v2047 = vsel %vm2035, %v2030, %v1848
  %v2048 = vsel %vm2035, %v2031, %v1850
  %v2049 = vsel %vm2035, %v2032, %v1852
  %v2050 = vsel %vm2035, %v2033, %v1854
  %v2051 = vsel %vm2035, %v2034, %v1856
  %vm2052 = vcmask 523264
  %v2053 = vsel %vm2052, %v2036, %v1890
  %v2054 = vsel %vm2052, %v2037, %v1892
  %v2055 = vsel %vm2052, %v2038, %v1894
  %v2056 = vsel %vm2052, %v2039, %v1896
  %v2057 = vsel %vm2052, %v2040, %v1898
  %v2058 = vsel %vm2052, %v2041, %v1900
  %v2059 = vsel %vm2052, %v2042, %v1902
  %v2060 = vsel %vm2052, %v2043, %v1904
  %v2061 = vsel %vm2052, %v2044, %v1906
  %v2062 = vsel %vm2052, %v2045, %v1908
  %v2063 = vsel %vm2052, %v2046, %v1910
  %v2064 = vsel %vm2052, %v2047, %v1912
  %v2065 = vsel %vm2052, %v2048, %v1914
  %v2066 = vsel %vm2052, %v2049, %v1916
  %v2067 = vsel %vm2052, %v2050, %v1918
  %v2068 = vsel %vm2052, %v2051, %v1920
  %v2069 = vld [vmem:[%s3] sm:$0xff]
  %v2070 = vld [vmem:[%s3 + $0x8] sm:$0xff]
  %v2071 = vld [vmem:[%s3 + $0x10] sm:$0xff]
  %v2072 = vld [vmem:[%s3 + $0x18] sm:$0xff]
  %v2073 = vld [vmem:[%s3 + $0x20] sm:$0xff]
  %v2074 = vld [vmem:[%s3 + $0x28] sm:$0xff]
  %v2075 = vld [vmem:[%s3 + $0x30] sm:$0xff]
  %v2076 = vld [vmem:[%s3 + $0x38] sm:$0xff]
  %v2077 = vld [vmem:[%s3 + $0x40] sm:$0xff]
  %v2078 = vld [vmem:[%s4] sm:$0x1]
  %v2080 = vperm.slane %v2078, 0
  %vm2082 = vcmask 588800
  %v2084 = vsel %vm2082, %v2053, 0
  %v2087 = vsel %vm2082, %v2054, 0
  %v2090 = vsel %vm2082, %v2055, 0
  %v2093 = vsel %vm2082, %v2056, 0
  %v2096 = vsel %vm2082, %v2057, 0
  %v2099 = vsel %vm2082, %v2058, 0
  %v2102 = vsel %vm2082, %v2059, 0
  %v2105 = vsel %vm2082, %v2060, 0
  %v2108 = vsel %vm2082, %v2061, 0
  %v2111 = vsel %vm2082, %v2062, 0
  %v2114 = vsel %vm2082, %v2063, 0
  %v2117 = vsel %vm2082, %v2064, 0
  %v2120 = vsel %vm2082, %v2065, 0
  %v2123 = vsel %vm2082, %v2066, 0
  %v2126 = vsel %vm2082, %v2067, 0
  %v2129 = vsel %vm2082, %v2068, 0
  %2131 = vmatpush.msra.mxu0 0.0
  %2132 = vmatpush.msra.mxu0 0.0
  %2133 = vmatpush.msra.mxu0 0.0
  %2134 = vmatpush.msra.mxu0 0.0
  %2135 = vmatpush.msra.mxu0 0.0
  %2136 = vmatpush.msra.mxu0 0.0
  %2137 = vmatpush.msra.mxu0 0.0
  %2138 = vmatpush.msra.mxu0 %v2077
  %2139 = vmatpush.msra.mxu0 %v2076
  %2140 = vmatpush.msra.mxu0 %v2075
  %2141 = vmatpush.msra.mxu0 %v2074
  %2142 = vmatpush.msra.mxu0 %v2073
  %2143 = vmatpush.msra.mxu0 %v2072
  %2144 = vmatpush.msra.mxu0 %v2071
  %2145 = vmatpush.msra.mxu0 %v2070
  %2146 = vmatpush.msra.mxu0 %v2069
  %2147 = vmatmul.f32.gmra.mxu0 %v2084
  %v2148 = vpop.f32.mrf.mxu0
  %v2149 = vadd.f32 %v2080, %v2148
  %2150 = vmatmul.f32.gmra.mxu0 %v2087
  %v2151 = vpop.f32.mrf.mxu0
  %v2152 = vadd.f32 %v2080, %v2151
  %2153 = vmatmul.f32.gmra.mxu0 %v2090
  %v2154 = vpop.f32.mrf.mxu0
  %v2155 = vadd.f32 %v2080, %v2154
  %2156 = vmatmul.f32.gmra.mxu0 %v2093
  %v2157 = vpop.f32.mrf.mxu0
  %v2158 = vadd.f32 %v2080, %v2157
  %2159 = vmatmul.f32.gmra.mxu0 %v2096
  %v2160 = vpop.f32.mrf.mxu0
  %v2161 = vadd.f32 %v2080, %v2160
  %2162 = vmatmul.f32.gmra.mxu0 %v2099
  %v2163 = vpop.f32.mrf.mxu0
  %v2164 = vadd.f32 %v2080, %v2163
  %2165 = vmatmul.f32.gmra.mxu0 %v2102
  %v2166 = vpop.f32.mrf.mxu0
  %v2167 = vadd.f32 %v2080, %v2166
  %2168 = vmatmul.f32.gmra.mxu0 %v2105
  %v2169 = vpop.f32.mrf.mxu0
  %v2170 = vadd.f32 %v2080, %v2169
  %2171 = vmatmul.f32.gmra.mxu0 %v2108
  %v2172 = vpop.f32.mrf.mxu0
  %v2173 = vadd.f32 %v2080, %v2172
  %2174 = vmatmul.f32.gmra.mxu0 %v2111
  %v2175 = vpop.f32.mrf.mxu0
  %v2176 = vadd.f32 %v2080, %v2175
  %2177 = vmatmul.f32.gmra.mxu0 %v2114
  %v2178 = vpop.f32.mrf.mxu0
  %v2179 = vadd.f32 %v2080, %v2178
  %2180 = vmatmul.f32.gmra.mxu0 %v2117
  %v2181 = vpop.f32.mrf.mxu0
  %v2182 = vadd.f32 %v2080, %v2181
  %2183 = vmatmul.f32.gmra.mxu0 %v2120
  %v2184 = vpop.f32.mrf.mxu0
  %v2185 = vadd.f32 %v2080, %v2184
  %2186 = vmatmul.f32.gmra.mxu0 %v2123
  %v2187 = vpop.f32.mrf.mxu0
  %v2188 = vadd.f32 %v2080, %v2187
  %2189 = vmatmul.f32.gmra.mxu0 %v2126
  %v2190 = vpop.f32.mrf.mxu0
  %v2191 = vadd.f32 %v2080, %v2190
  %2192 = vmatmul.f32.gmra.mxu0 %v2129
  %v2193 = vpop.f32.mrf.mxu0
  %v2194 = vadd.f32 %v2080, %v2193
  %2195 = vdwg.mxu0
  %v2196 = vmax.f32 %v2149, 0.0
  %v2197 = vmax.f32 %v2152, 0.0
  %v2198 = vmax.f32 %v2155, 0.0
  %v2199 = vmax.f32 %v2158, 0.0
  %v2200 = vmax.f32 %v2161, 0.0
  %v2201 = vmax.f32 %v2164, 0.0
  %v2202 = vmax.f32 %v2167, 0.0
  %v2203 = vmax.f32 %v2170, 0.0
  %v2204 = vmax.f32 %v2173, 0.0
  %v2205 = vmax.f32 %v2176, 0.0
  %v2206 = vmax.f32 %v2179, 0.0
  %v2207 = vmax.f32 %v2182, 0.0
  %v2208 = vmax.f32 %v2185, 0.0
  %v2209 = vmax.f32 %v2188, 0.0
  %v2210 = vmax.f32 %v2191, 0.0
  %v2211 = vmax.f32 %v2194, 0.0
  %v2228 = vrot.slane %v2197, 7
  %vm2229 = vcmask 1041409
  %v2230 = vsel %vm2229, %v2228, %v2196
  %v2231 = vrot.slane %v2198, 6
  %vm2232 = vcmask 1042434
  %v2233 = vsel %vm2232, %v2231, %v2230
  %v2234 = vrot.slane %v2199, 5
  %vm2235 = vcmask 1043459
  %v2236 = vsel %vm2235, %v2234, %v2233
  %v2237 = vrot.slane %v2200, 4
  %vm2238 = vcmask 1044484
  %v2239 = vsel %vm2238, %v2237, %v2236
  %v2240 = vrot.slane %v2201, 3
  %vm2241 = vcmask 1045509
  %v2242 = vsel %vm2241, %v2240, %v2239
  %v2243 = vrot.slane %v2202, 2
  %vm2244 = vcmask 1046534
  %v2245 = vsel %vm2244, %v2243, %v2242
  %v2246 = vrot.slane %v2203, 1
  %vm2247 = vcmask 1047559
  %v2248 = vsel %vm2247, %v2246, %v2245
  %v2249 = vrot.slane %v2205, 7
  %v2250 = vsel %vm2229, %v2249, %v2204
  %v2251 = vrot.slane %v2206, 6
  %v2252 = vsel %vm2232, %v2251, %v2250
  %v2253 = vrot.slane %v2207, 5
  %v2254 = vsel %vm2235, %v2253, %v2252
  %v2255 = vrot.slane %v2208, 4
  %v2256 = vsel %vm2238, %v2255, %v2254
  %v2257 = vrot.slane %v2209, 3
  %v2258 = vsel %vm2241, %v2257, %v2256
  %v2259 = vrot.slane %v2210, 2
  %v2260 = vsel %vm2244, %v2259, %v2258
  %v2261 = vrot.slane %v2211, 1
  %v2262 = vsel %vm2247, %v2261, %v2260
  %v2265 = vrot.slane %v2196, 1
  %v2266 = vsel %vm2229, %v2197, %v2265
  %v2267 = vrot.slane %v2198, 7
  %v2268 = vsel %vm2232, %v2267, %v2266
  %v2269 = vrot.slane %v2199, 6
  %v2270 = vsel %vm2235, %v2269, %v2268
  %v2271 = vrot.slane %v2200, 5
  %v2272 = vsel %vm2238, %v2271, %v2270
  %v2273 = vrot.slane %v2201, 4
  %v2274 = vsel %vm2241, %v2273, %v2272
  %v2275 = vrot.slane %v2202, 3
  %v2276 = vsel %vm2244, %v2275, %v2274
  %v2277 = vrot.slane %v2203, 2
  %v2278 = vsel %vm2247, %v2277, %v2276
  %v2279 = vrot.slane %v2204, 1
  %v2280 = vsel %vm2229, %v2205, %v2279
  %v2281 = vrot.slane %v2206, 7
  %v2282 = vsel %vm2232, %v2281, %v2280
  %v2283 = vrot.slane %v2207, 6
  %v2284 = vsel %vm2235, %v2283, %v2282
  %v2285 = vrot.slane %v2208, 5
  %v2286 = vsel %vm2238, %v2285, %v2284
  %v2287 = vrot.slane %v2209, 4
  %v2288 = vsel %vm2241, %v2287, %v2286
  %v2289 = vrot.slane %v2210, 3
  %v2290 = vsel %vm2244, %v2289, %v2288
  %v2291 = vrot.slane %v2211, 2
  %v2292 = vsel %vm2247, %v2291, %v2290
  %2293 = vrot.lane.b32.xlu0 %v2278, 8
  %v2294 = vpop.permute.xlu0 %2293
  %2295 = vrot.lane.b32.xlu0 %v2292, 8
  %v2296 = vpop.permute.xlu0 %2295
  %v2299 = vrot.slane %v2196, 2
  %v2300 = vrot.slane %v2197, 1
  %v2301 = vsel %vm2229, %v2300, %v2299
  %v2302 = vsel %vm2232, %v2198, %v2301
  %v2303 = vrot.slane %v2199, 7
  %v2304 = vsel %vm2235, %v2303, %v2302
  %v2305 = vrot.slane %v2200, 6
  %v2306 = vsel %vm2238, %v2305, %v2304
  %v2307 = vrot.slane %v2201, 5
  %v2308 = vsel %vm2241, %v2307, %v2306
  %v2309 = vrot.slane %v2202, 4
  %v2310 = vsel %vm2244, %v2309, %v2308
  %v2311 = vrot.slane %v2203, 3
  %v2312 = vsel %vm2247, %v2311, %v2310
  %v2313 = vrot.slane %v2204, 2
  %v2314 = vrot.slane %v2205, 1
  %v2315 = vsel %vm2229, %v2314, %v2313
  %v2316 = vsel %vm2232, %v2206, %v2315
  %v2317 = vrot.slane %v2207, 7
  %v2318 = vsel %vm2235, %v2317, %v2316
  %v2319 = vrot.slane %v2208, 6
  %v2320 = vsel %vm2238, %v2319, %v2318
  %v2321 = vrot.slane %v2209, 5
  %v2322 = vsel %vm2241, %v2321, %v2320
  %v2323 = vrot.slane %v2210, 4
  %v2324 = vsel %vm2244, %v2323, %v2322
  %v2325 = vrot.slane %v2211, 3
  %v2326 = vsel %vm2247, %v2325, %v2324
  %2327 = vrot.lane.b32.xlu0 %v2312, 16
  %v2328 = vpop.permute.xlu0 %2327
  %2329 = vrot.lane.b32.xlu0 %v2326, 16
  %v2330 = vpop.permute.xlu0 %2329
  %v2333 = vrot.slane %v2196, 3
  %v2334 = vrot.slane %v2197, 2
  %v2335 = vsel %vm2229, %v2334, %v2333
  %v2336 = vrot.slane %v2198, 1
  %v2337 = vsel %vm2232, %v2336, %v2335
  %v2338 = vsel %vm2235, %v2199, %v2337
  %v2339 = vrot.slane %v2200, 7
  %v2340 = vsel %vm2238, %v2339, %v2338
  %v2341 = vrot.slane %v2201, 6
  %v2342 = vsel %vm2241, %v2341, %v2340
  %v2343 = vrot.slane %v2202, 5
  %v2344 = vsel %vm2244, %v2343, %v2342
  %v2345 = vrot.slane %v2203, 4
  %v2346 = vsel %vm2247, %v2345, %v2344
  %v2347 = vrot.slane %v2204, 3
  %v2348 = vrot.slane %v2205, 2
  %v2349 = vsel %vm2229, %v2348, %v2347
  %v2350 = vrot.slane %v2206, 1
  %v2351 = vsel %vm2232, %v2350, %v2349
  %v2352 = vsel %vm2235, %v2207, %v2351
  %v2353 = vrot.slane %v2208, 7
  %v2354 = vsel %vm2238, %v2353, %v2352
  %v2355 = vrot.slane %v2209, 6
  %v2356 = vsel %vm2241, %v2355, %v2354
  %v2357 = vrot.slane %v2210, 5
  %v2358 = vsel %vm2244, %v2357, %v2356
  %v2359 = vrot.slane %v2211, 4
  %v2360 = vsel %vm2247, %v2359, %v2358
  %2361 = vrot.lane.b32.xlu0 %v2346, 24
  %v2362 = vpop.permute.xlu0 %2361
  %2363 = vrot.lane.b32.xlu0 %v2360, 24
  %v2364 = vpop.permute.xlu0 %2363
  %v2367 = vrot.slane %v2196, 4
  %v2368 = vrot.slane %v2197, 3
  %v2369 = vsel %vm2229, %v2368, %v2367
  %v2370 = vrot.slane %v2198, 2
  %v2371 = vsel %vm2232, %v2370, %v2369
  %v2372 = vrot.slane %v2199, 1
  %v2373 = vsel %vm2235, %v2372, %v2371
  %v2374 = vsel %vm2238, %v2200, %v2373
  %v2375 = vrot.slane %v2201, 7
  %v2376 = vsel %vm2241, %v2375, %v2374
  %v2377 = vrot.slane %v2202, 6
  %v2378 = vsel %vm2244, %v2377, %v2376
  %v2379 = vrot.slane %v2203, 5
  %v2380 = vsel %vm2247, %v2379, %v2378
  %v2381 = vrot.slane %v2204, 4
  %v2382 = vrot.slane %v2205, 3
  %v2383 = vsel %vm2229, %v2382, %v2381
  %v2384 = vrot.slane %v2206, 2
  %v2385 = vsel %vm2232, %v2384, %v2383
  %v2386 = vrot.slane %v2207, 1
  %v2387 = vsel %vm2235, %v2386, %v2385
  %v2388 = vsel %vm2238, %v2208, %v2387
  %v2389 = vrot.slane %v2209, 7
  %v2390 = vsel %vm2241, %v2389, %v2388
  %v2391 = vrot.slane %v2210, 6
  %v2392 = vsel %vm2244, %v2391, %v2390
  %v2393 = vrot.slane %v2211, 5
  %v2394 = vsel %vm2247, %v2393, %v2392
  %2395 = vrot.lane.b32.xlu0 %v2380, 32
  %v2396 = vpop.permute.xlu0 %2395
  %2397 = vrot.lane.b32.xlu0 %v2394, 32
  %v2398 = vpop.permute.xlu0 %2397
  %v2401 = vrot.slane %v2196, 5
  %v2402 = vrot.slane %v2197, 4
  %v2403 = vsel %vm2229, %v2402, %v2401
  %v2404 = vrot.slane %v2198, 3
  %v2405 = vsel %vm2232, %v2404, %v2403
  %v2406 = vrot.slane %v2199, 2
  %v2407 = vsel %vm2235, %v2406, %v2405
  %v2408 = vrot.slane %v2200, 1
  %v2409 = vsel %vm2238, %v2408, %v2407
  %v2410 = vsel %vm2241, %v2201, %v2409
  %v2411 = vrot.slane %v2202, 7
  %v2412 = vsel %vm2244, %v2411, %v2410
  %v2413 = vrot.slane %v2203, 6
  %v2414 = vsel %vm2247, %v2413, %v2412
  %v2415 = vrot.slane %v2204, 5
  %v2416 = vrot.slane %v2205, 4
  %v2417 = vsel %vm2229, %v2416, %v2415
  %v2418 = vrot.slane %v2206, 3
  %v2419 = vsel %vm2232, %v2418, %v2417
  %v2420 = vrot.slane %v2207, 2
  %v2421 = vsel %vm2235, %v2420, %v2419
  %v2422 = vrot.slane %v2208, 1
  %v2423 = vsel %vm2238, %v2422, %v2421
  %v2424 = vsel %vm2241, %v2209, %v2423
  %v2425 = vrot.slane %v2210, 7
  %v2426 = vsel %vm2244, %v2425, %v2424
  %v2427 = vrot.slane %v2211, 6
  %v2428 = vsel %vm2247, %v2427, %v2426
  %2429 = vrot.lane.b32.xlu0 %v2414, 40
  %v2430 = vpop.permute.xlu0 %2429
  %2431 = vrot.lane.b32.xlu0 %v2428, 40
  %v2432 = vpop.permute.xlu0 %2431
  %v2435 = vrot.slane %v2196, 6
  %v2436 = vrot.slane %v2197, 5
  %v2437 = vsel %vm2229, %v2436, %v2435
  %v2438 = vrot.slane %v2198, 4
  %v2439 = vsel %vm2232, %v2438, %v2437
  %v2440 = vrot.slane %v2199, 3
  %v2441 = vsel %vm2235, %v2440, %v2439
  %v2442 = vrot.slane %v2200, 2
  %v2443 = vsel %vm2238, %v2442, %v2441
  %v2444 = vrot.slane %v2201, 1
  %v2445 = vsel %vm2241, %v2444, %v2443
  %v2446 = vsel %vm2244, %v2202, %v2445
  %v2447 = vrot.slane %v2203, 7
  %v2448 = vsel %vm2247, %v2447, %v2446
  %v2449 = vrot.slane %v2204, 6
  %v2450 = vrot.slane %v2205, 5
  %v2451 = vsel %vm2229, %v2450, %v2449
  %v2452 = vrot.slane %v2206, 4
  %v2453 = vsel %vm2232, %v2452, %v2451
  %v2454 = vrot.slane %v2207, 3
  %v2455 = vsel %vm2235, %v2454, %v2453
  %v2456 = vrot.slane %v2208, 2
  %v2457 = vsel %vm2238, %v2456, %v2455
  %v2458 = vrot.slane %v2209, 1
  %v2459 = vsel %vm2241, %v2458, %v2457
  %v2460 = vsel %vm2244, %v2210, %v2459
  %v2461 = vrot.slane %v2211, 7
  %v2462 = vsel %vm2247, %v2461, %v2460
  %2463 = vrot.lane.b32.xlu0 %v2448, 48
  %v2464 = vpop.permute.xlu0 %2463
  %2465 = vrot.lane.b32.xlu0 %v2462, 48
  %v2466 = vpop.permute.xlu0 %2465
  %v2469 = vrot.slane %v2196, 7
  %v2470 = vrot.slane %v2197, 6
  %v2471 = vsel %vm2229, %v2470, %v2469
  %v2472 = vrot.slane %v2198, 5
  %v2473 = vsel %vm2232, %v2472, %v2471
  %v2474 = vrot.slane %v2199, 4
  %v2475 = vsel %vm2235, %v2474, %v2473
  %v2476 = vrot.slane %v2200, 3
  %v2477 = vsel %vm2238, %v2476, %v2475
  %v2478 = vrot.slane %v2201, 2
  %v2479 = vsel %vm2241, %v2478, %v2477
  %v2480 = vrot.slane %v2202, 1
  %v2481 = vsel %vm2244, %v2480, %v2479
  %v2482 = vsel %vm2247, %v2203, %v2481
  %v2483 = vrot.slane %v2204, 7
  %v2484 = vrot.slane %v2205, 6
  %v2485 = vsel %vm2229, %v2484, %v2483
  %v2486 = vrot.slane %v2206, 5
  %v2487 = vsel %vm2232, %v2486, %v2485
  %v2488 = vrot.slane %v2207, 4
  %v2489 = vsel %vm2235, %v2488, %v2487
  %v2490 = vrot.slane %v2208, 3
  %v2491 = vsel %vm2238, %v2490, %v2489
  %v2492 = vrot.slane %v2209, 2
  %v2493 = vsel %vm2241, %v2492, %v2491
  %v2494 = vrot.slane %v2210, 1
  %v2495 = vsel %vm2244, %v2494, %v2493
  %v2496 = vsel %vm2247, %v2211, %v2495
  %2497 = vrot.lane.b32.xlu0 %v2482, 56
  %v2498 = vpop.permute.xlu0 %2497
  %2499 = vrot.lane.b32.xlu0 %v2496, 56
  %v2500 = vpop.permute.xlu0 %2499
  %v2503 = vsel %vm270, %v2248, %v2294
  %v2504 = vsel %vm270, %v2262, %v2296
  %v2505 = vsel %vm1035, %v2503, %v2328
  %v2506 = vsel %vm1035, %v2504, %v2330
  %v2507 = vsel %vm1069, %v2505, %v2362
  %v2508 = vsel %vm1069, %v2506, %v2364
  %v2509 = vsel %vm1103, %v2507, %v2396
  %v2510 = vsel %vm1103, %v2508, %v2398
  %v2511 = vsel %vm2001, %v2509, %v2430
  %v2512 = vsel %vm2001, %v2510, %v2432
  %v2513 = vsel %vm2018, %v2511, %v2464
  %v2514 = vsel %vm2018, %v2512, %v2466
  %v2515 = vsel %vm2035, %v2513, %v2498
  %v2516 = vsel %vm2035, %v2514, %v2500
  %v2519 = vrot.slane %v2516, 7
  %v2520 = vsel %vm2229, %v2519, %v2515
  %v2522 = vrot.slane %v2515, 1
  %v2523 = vsel %vm2229, %v2516, %v2522
  %2524 = vrot.lane.b32.xlu0 %v2523, 64
  %v2525 = vpop.permute.xlu0 %2524
  %v2527 = vrot.slane %v2515, 2
  %v2528 = vrot.slane %v2516, 1
  %v2529 = vsel %vm2229, %v2528, %v2527
  %v2531 = vrot.slane %v2515, 3
  %v2532 = vrot.slane %v2516, 2
  %v2533 = vsel %vm2229, %v2532, %v2531
  %2534 = vrot.lane.b32.xlu0 %v2533, 64
  %v2535 = vpop.permute.xlu0 %2534
  %v2537 = vrot.slane %v2515, 4
  %v2538 = vrot.slane %v2516, 3
  %v2539 = vsel %vm2229, %v2538, %v2537
  %v2541 = vrot.slane %v2515, 5
  %v2542 = vrot.slane %v2516, 4
  %v2543 = vsel %vm2229, %v2542, %v2541
  %2544 = vrot.lane.b32.xlu0 %v2543, 64
  %v2545 = vpop.permute.xlu0 %2544
  %v2547 = vrot.slane %v2515, 6
  %v2548 = vrot.slane %v2516, 5
  %v2549 = vsel %vm2229, %v2548, %v2547
  %v2551 = vrot.slane %v2515, 7
  %v2552 = vrot.slane %v2516, 6
  %v2553 = vsel %vm2229, %v2552, %v2551
  %2554 = vrot.lane.b32.xlu0 %v2553, 64
  %v2555 = vpop.permute.xlu0 %2554
  %v2557 = vsel %vm2052, %v2520, %v2525
  %v2558 = vsel %vm2052, %v2529, %v2535
  %v2559 = vsel %vm2052, %v2539, %v2545
  %v2560 = vsel %vm2052, %v2549, %v2555
  %v2565 = vrot.slane %v2558, 6
  %v2566 = vrot.slane %v2559, 4
  %v2567 = vrot.slane %v2560, 2
  %vm2568 = vcmask 1041408
  %v2569 = vsel %vm2568, %v2557, %v2565
  %vm2570 = vcmask 1045508
  %v2571 = vsel %vm2570, %v2566, %v2567
  %v2572 = vsel %vm1178, %v2569, %v2571
  %2574 = vst [vmem:[%s5] sm:$0xff] %v2572
  // Predicated region
  $region22: #{downblock_forward.1} parent=0 // pred_check
    _
  $region23: #{downblock_forward.1} parent=0 // pred_check_branch
    %2576 = sbr.rel (0) target = $region25
  $region24: #{downblock_forward.1} parent=0 // pred_region
    _
  $region25: #{downblock_forward.1} parent=0 // pred_fallthru
    _
  // Predicated region
  $region26: #{downblock_forward.1} parent=0 // pred_check
    _
  $region27: #{downblock_forward.1} parent=0 // pred_check_branch
    %2578 = sbr.rel (0) target = $region29
  $region28: #{downblock_forward.1} parent=0 // pred_region
    _
  $region29: #{downblock_forward.1} parent=0 // pred_fallthru
    _

</llo_original>
